<compile_context>
chip_gen: v6e
topology: v6e:2x2x1
jax: 0.10.0
libtpu: 0.0.40
codegen_flags: <defaults>
</compile_context>

<pallas_src>
import jax
import jax.numpy as jnp
from jax.experimental import pallas as pl
from jax.experimental.pallas import tpu as pltpu


def motion_encoder_kernel(corr_ref, flow_ref, wbig_ref, small_ref, out_ref):
    # corr_ref : (64, tn)   correlation features, channels-first
    # flow_ref : (3, tn)    flow, channels-first
    # wbig_ref : (192, 64)  [Wc ; W1 ; W2] stacked on the sublane axis
    # small_ref: (128, 8)   cols 0:3 = [Wf ; Sel], col 3 = bc, col 4 = bf,
    #                       col 5 = b_pad (rows 64:128 of cols 3:8 are zero)
    # out_ref  : (64, tn)
    corr = corr_ref[...]
    flow = flow_ref[...]

    wc = wbig_ref[0:64, :]        # (64, 64) conv_corr weight
    w1 = wbig_ref[64:128, :]      # (64, 64) final conv, cor half (rows 61..63 zero)
    w2 = wbig_ref[128:192, :]     # (64, 64) final conv, flo half (rows 61..63 zero)

    small = small_ref[...]        # (128, 8)
    wfs = small[:, 0:3]           # (128, 3): rows 0:64 = conv_flow W, 64:128 = selector
    bc = small[0:64, 3:4]         # (64, 1)
    bf = small[0:64, 4:5]         # (64, 1)
    bp = small[0:64, 5:6]         # (64, 1) final conv bias, rows 61..63 zero

    # cor = relu(conv_corr(corr))                        -- (64,64) @ (64,tn)
    cor = jnp.maximum(
        jnp.dot(wc, corr, preferred_element_type=jnp.float32) + bc, 0.0)

    # One fused K=3 matmul: rows 0:64 -> conv_flow pre-activation,
    # rows 64:128 -> raw flow scattered into output channels 61..63.
    fs = jnp.dot(wfs, flow, preferred_element_type=jnp.float32)      # (128, tn)
    flo = jnp.maximum(fs[0:64, :] + bf, 0.0)
    scatter = fs[64:128, :]       # zeros in rows 0..60, raw flow in rows 61..63

    # out_conv = relu(conv(cat[cor, flo])) WITHOUT materialising the concat.
    # Rows 61..63 of w1/w2/bp are exactly zero, so out_conv rows 61..63 are
    # relu(0) == 0 and the selector add fills them with the raw flow.
    out_conv = jnp.maximum(
        jnp.dot(w1, cor.astype(w1.dtype), preferred_element_type=jnp.float32)
        + jnp.dot(w2, flo.astype(w2.dtype), preferred_element_type=jnp.float32)
        + bp,
        0.0)

    out_ref[...] = (out_conv + scatter).astype(out_ref.dtype)


def _pick_tile(n_pad, batch, max_tn=16384):
    """Largest multiple-of-128 tile dividing n_pad, capped so that
    (a) double-buffered VMEM stays ~<= 17 MiB (max_tn=16384 f32) and
    (b) B == 1 still yields >= 2 parallel grid steps for v7x's 2 TensorCores."""
    cap = max_tn
    if batch == 1 and n_pad > 128:
        cap = min(cap, max(128, (n_pad // 2) // 128 * 128))
    best = 128
    t = 128
    limit = min(cap, n_pad)
    while t <= limit:
        if n_pad % t == 0:
            best = t
        t += 128
    return best


def motion_encoder(flow, corr, params, *, tn=None, dtype=jnp.float32):
    """flow: (B, N, 3); corr: (B, 64, N).  Returns (B, 64, N) like PyTorch.

    dtype: I/O + matmul-operand dtype.  float32 by default; pass jnp.bfloat16
    to halve HBM traffic and use the MXU's native bf16 path (accumulation
    stays f32 either way).
    """
    B, N, _ = flow.shape
    assert corr.shape == (B, 64, N), corr.shape

    # Pad the point axis to a multiple of 128 -> every load/store lane-dense.
    n_pad = ((N + 127) // 128) * 128
    if tn is None:
        tn = _pick_tile(n_pad, B)
    assert n_pad % tn == 0 and tn % 128 == 0, (n_pad, tn)

    corr = corr.astype(dtype)
    # Only the tiny 3-channel flow is transposed to channels-first.
    # TODO(synk): this wrapper transpose costs ~4.6% extra HBM traffic; it
    # could be folded into the kernel with a transposed dot_general.
    flow_cf = jnp.transpose(flow.astype(dtype), (0, 2, 1))           # (B, 3, N)
    if n_pad != N:
        corr = jnp.pad(corr, ((0, 0), (0, 0), (0, n_pad - N)))
        flow_cf = jnp.pad(flow_cf, ((0, 0), (0, 0), (0, n_pad - N)))

    # ---- pack the constant weights into two slabs ---------------------------
    wc = params["wc"].astype(dtype)                                   # (64, 64)
    wf = params["wf"].astype(dtype)                                   # (64, 3)
    w = params["w"].astype(dtype)                                     # (61, 128)
    # Zero-pad the final conv to 64 output channels, split K=128 into 64+64.
    # NOTE: rows 61..63 of w1/w2 and of the padded bias MUST stay zero -- the
    # kernel relies on relu(0) == 0 there so the selector add can place the
    # raw flow into output channels 61..63.
    w1 = jnp.zeros((64, 64), dtype).at[:61].set(w[:, :64])
    w2 = jnp.zeros((64, 64), dtype).at[:61].set(w[:, 64:])
    wbig = jnp.concatenate([wc, w1, w2], axis=0)                      # (192, 64)

    sel = jnp.zeros((64, 3), dtype).at[jnp.arange(61, 64), jnp.arange(3)].set(1.0)
    small = jnp.zeros((128, 8), dtype)
    small = small.at[0:64, 0:3].set(wf)
    small = small.at[64:128, 0:3].set(sel)
    small = small.at[0:64, 3].set(params["bc"].astype(dtype))
    small = small.at[0:64, 4].set(params["bf"].astype(dtype))
    small = small.at[0:64, 5].set(
        jnp.zeros((64,), dtype).at[:61].set(params["b"].astype(dtype)))

    # ---- pallas_call ---------------------------------------------------------
    M = B * n_pad
    esize = jnp.dtype(dtype).itemsize
    cost = pl.CostEstimate(
        flops=2 * M * (64 * 64 + 128 * 3 + 64 * 64 + 64 * 64),
        transcendentals=0,
        bytes_accessed=esize * (M * 64 + M * 3 + M * 64)
        + esize * (192 * 64 + 128 * 8),
    )

    const2 = lambda b, j: (0, 0)
    out = pl.pallas_call(
        motion_encoder_kernel,
        out_shape=jax.ShapeDtypeStruct((B, 64, n_pad), dtype),
        grid_spec=pltpu.PrefetchScalarGridSpec(
            num_scalar_prefetch=0,
            grid=(B, n_pad // tn),
            in_specs=[
                pl.BlockSpec((None, 64, tn), lambda b, j: (b, 0, j)),  # corr
                pl.BlockSpec((None, 3, tn), lambda b, j: (b, 0, j)),   # flow (CF)
                pl.BlockSpec((192, 64), const2),                       # weight slab
                pl.BlockSpec((128, 8), const2),                        # small slab
            ],
            out_specs=pl.BlockSpec((None, 64, tn), lambda b, j: (b, 0, j)),
        ),
        compiler_params=pltpu.CompilerParams(
            dimension_semantics=("parallel", "parallel"),
            vmem_limit_bytes=32 * 1024 * 1024,
        ),
        cost_estimate=cost,
    )(corr, flow_cf, wbig, small)

    if n_pad != N:
        out = out[:, :, :N]
    return out  # (B, 64, N) -- no wrapper transpose back


def motion_encoder_ref(flow, corr, params):
    """Pure-JAX reference mirroring the PyTorch forward."""
    flow_t = jnp.transpose(flow, (0, 2, 1))                           # (B, 3, N)
    cor = jax.nn.relu(
        jnp.einsum("oi,bin->bon", params["wc"], corr) + params["bc"][None, :, None]
    )
    flo = jax.nn.relu(
        jnp.einsum("oi,bin->bon", params["wf"], flow_t) + params["bf"][None, :, None]
    )
    cor_flo = jnp.concatenate([cor, flo], axis=1)                     # (B, 128, N)
    out_conv = jax.nn.relu(
        jnp.einsum("oi,bin->bon", params["w"], cor_flo) + params["b"][None, :, None]
    )
    return jnp.concatenate([out_conv, flow_t], axis=1)                # (B, 64, N)


def init_params(key):
    ks = jax.random.split(key, 6)
    # Conv1d(64, 64, 1), Conv1d(3, 64, 1), Conv1d(128, 61, 1)
    return {
        "wc": jax.random.normal(ks[0], (64, 64), jnp.float32) * 0.1,
        "bc": jax.random.normal(ks[1], (64,), jnp.float32) * 0.1,
        "wf": jax.random.normal(ks[2], (64, 3), jnp.float32) * 0.1,
        "bf": jax.random.normal(ks[3], (64,), jnp.float32) * 0.1,
        "w": jax.random.normal(ks[4], (61, 128), jnp.float32) * 0.1,
        "b": jax.random.normal(ks[5], (61,), jnp.float32) * 0.1,
    }


if __name__ == "__main__":
    key = jax.random.PRNGKey(0)
    kp, kf, kc, kf2, kc2 = jax.random.split(key, 5)
    params = init_params(kp)

    # Case 1: B=2, N a multiple of 128 (no padding path).
    B, N = 2, 512
    flow = jax.random.normal(kf, (B, N, 3), jnp.float32)     # (B, N, 3)
    corr = jax.random.normal(kc, (B, 64, N), jnp.float32)    # (B, 64, N)
    out = jax.block_until_ready(motion_encoder(flow, corr, params))
    ref = motion_encoder_ref(flow, corr, params)
    assert out.shape == (B, 64, N)
    assert jnp.allclose(out, ref, atol=1e-4, rtol=1e-4), "mismatch vs reference (N=512)"

    # Case 2: B=1, N not a multiple of 128 (exercises padding/crop and the
    # >=2-grid-step cap for the single-batch case).
    B2, N2 = 1, 200
    flow2 = jax.random.normal(kf2, (B2, N2, 3), jnp.float32)
    corr2 = jax.random.normal(kc2, (B2, 64, N2), jnp.float32)
    out2 = jax.block_until_ready(motion_encoder(flow2, corr2, params))
    ref2 = motion_encoder_ref(flow2, corr2, params)
    assert out2.shape == (B2, 64, N2)
    assert jnp.allclose(out2, ref2, atol=1e-4, rtol=1e-4), "mismatch vs reference (N=200)"

    print("KERNEL_OK")
</pallas_src>

<mosaic_0001>
module attributes {stable_mosaic.version = 11 : i64} {
  func.func @motion_encoder_kernel(%arg0: i32, %arg1: i32, %arg2: memref<1x64x512xf32, #tpu.memory_space<vmem>>, %arg3: memref<1x3x512xf32, #tpu.memory_space<vmem>>, %arg4: memref<192x64xf32, #tpu.memory_space<vmem>>, %arg5: memref<128x8xf32, #tpu.memory_space<vmem>>, %arg6: memref<1x64x512xf32, #tpu.memory_space<vmem>>) attributes {dimension_semantics = [#tpu.dimension_semantics<parallel>, #tpu.dimension_semantics<parallel>], iteration_bounds = array<i64: 2, 1>, scalar_prefetch = 0 : i64, scratch_operands = 0 : i64, tpu.core_type = #tpu.core_type<tc>, window_params = [{transform_indices = @transform_0, window_bounds = array<i64: 1, 64, 512>}, {transform_indices = @transform_1, window_bounds = array<i64: 1, 3, 512>}, {pipeline_mode = #tpu.pipeline_mode<synchronous>, transform_indices = @transform_2, window_bounds = array<i64: 192, 64>}, {pipeline_mode = #tpu.pipeline_mode<synchronous>, transform_indices = @transform_3, window_bounds = array<i64: 128, 8>}, {transform_indices = @transform_4, window_bounds = array<i64: 1, 64, 512>}]} {
    %c0 = arith.constant 0 : index
    %c0_0 = arith.constant 0 : index
    %c0_1 = arith.constant 0 : index
    %0 = vector.load %arg2[%c0, %c0_0, %c0_1] : memref<1x64x512xf32, #tpu.memory_space<vmem>>, vector<1x64x512xf32>
    %1 = vector.shape_cast %0 : vector<1x64x512xf32> to vector<64x512xf32>
    %c0_2 = arith.constant 0 : index
    %c0_3 = arith.constant 0 : index
    %c0_4 = arith.constant 0 : index
    %2 = vector.load %arg3[%c0_2, %c0_3, %c0_4] : memref<1x3x512xf32, #tpu.memory_space<vmem>>, vector<1x3x512xf32>
    %3 = vector.shape_cast %2 : vector<1x3x512xf32> to vector<3x512xf32>
    %c0_5 = arith.constant 0 : index
    %c0_6 = arith.constant 0 : index
    %4 = vector.load %arg4[%c0_5, %c0_6] : memref<192x64xf32, #tpu.memory_space<vmem>>, vector<64x64xf32>
    %c64 = arith.constant 64 : index
    %c0_7 = arith.constant 0 : index
    %5 = vector.load %arg4[%c64, %c0_7] : memref<192x64xf32, #tpu.memory_space<vmem>>, vector<64x64xf32>
    %c128 = arith.constant 128 : index
    %c0_8 = arith.constant 0 : index
    %6 = vector.load %arg4[%c128, %c0_8] : memref<192x64xf32, #tpu.memory_space<vmem>>, vector<64x64xf32>
    %c0_9 = arith.constant 0 : index
    %c0_10 = arith.constant 0 : index
    %7 = vector.load %arg5[%c0_9, %c0_10] : memref<128x8xf32, #tpu.memory_space<vmem>>, vector<128x8xf32>
    %8 = vector.extract_strided_slice %7 {offsets = [0, 0], sizes = [128, 3], strides = [1, 1]} : vector<128x8xf32> to vector<128x3xf32>
    %9 = vector.extract_strided_slice %7 {offsets = [0, 3], sizes = [64, 1], strides = [1, 1]} : vector<128x8xf32> to vector<64x1xf32>
    %10 = vector.extract_strided_slice %7 {offsets = [0, 4], sizes = [64, 1], strides = [1, 1]} : vector<128x8xf32> to vector<64x1xf32>
    %11 = vector.extract_strided_slice %7 {offsets = [0, 5], sizes = [64, 1], strides = [1, 1]} : vector<128x8xf32> to vector<64x1xf32>
    %cst = arith.constant dense<0.000000e+00> : vector<64x512xf32>
    %12 = tpu.matmul %4, %1, %cst {dimension_numbers = #tpu.dot_dimension_numbers<[1], [0], [0], [1], [0, 0, 1, 1], [], []>} : vector<64x64xf32>, vector<64x512xf32>, vector<64x512xf32> -> vector<64x512xf32>
    %13 = vector.broadcast %9 : vector<64x1xf32> to vector<64x512xf32>
    %14 = arith.addf %12, %13 : vector<64x512xf32>
    %cst_11 = arith.constant 0.000000e+00 : f32
    %15 = vector.broadcast %cst_11 : f32 to vector<64x512xf32>
    %16 = arith.maximumf %14, %15 : vector<64x512xf32>
    %cst_12 = arith.constant dense<0.000000e+00> : vector<128x512xf32>
    %17 = tpu.matmul %8, %3, %cst_12 {dimension_numbers = #tpu.dot_dimension_numbers<[1], [0], [0], [1], [0, 0, 1, 1], [], []>} : vector<128x3xf32>, vector<3x512xf32>, vector<128x512xf32> -> vector<128x512xf32>
    %18 = vector.extract_strided_slice %17 {offsets = [0, 0], sizes = [64, 512], strides = [1, 1]} : vector<128x512xf32> to vector<64x512xf32>
    %19 = vector.broadcast %10 : vector<64x1xf32> to vector<64x512xf32>
    %20 = arith.addf %18, %19 : vector<64x512xf32>
    %cst_13 = arith.constant 0.000000e+00 : f32
    %21 = vector.broadcast %cst_13 : f32 to vector<64x512xf32>
    %22 = arith.maximumf %20, %21 : vector<64x512xf32>
    %23 = vector.extract_strided_slice %17 {offsets = [64, 0], sizes = [64, 512], strides = [1, 1]} : vector<128x512xf32> to vector<64x512xf32>
    %cst_14 = arith.constant dense<0.000000e+00> : vector<64x512xf32>
    %24 = tpu.matmul %5, %16, %cst_14 {dimension_numbers = #tpu.dot_dimension_numbers<[1], [0], [0], [1], [0, 0, 1, 1], [], []>} : vector<64x64xf32>, vector<64x512xf32>, vector<64x512xf32> -> vector<64x512xf32>
    %cst_15 = arith.constant dense<0.000000e+00> : vector<64x512xf32>
    %25 = tpu.matmul %6, %22, %cst_15 {dimension_numbers = #tpu.dot_dimension_numbers<[1], [0], [0], [1], [0, 0, 1, 1], [], []>} : vector<64x64xf32>, vector<64x512xf32>, vector<64x512xf32> -> vector<64x512xf32>
    %26 = arith.addf %24, %25 : vector<64x512xf32>
    %27 = vector.broadcast %11 : vector<64x1xf32> to vector<64x512xf32>
    %28 = arith.addf %26, %27 : vector<64x512xf32>
    %cst_16 = arith.constant 0.000000e+00 : f32
    %29 = vector.broadcast %cst_16 : f32 to vector<64x512xf32>
    %30 = arith.maximumf %28, %29 : vector<64x512xf32>
    %31 = arith.addf %30, %23 : vector<64x512xf32>
    %c0_17 = arith.constant 0 : index
    %c0_18 = arith.constant 0 : index
    %c0_19 = arith.constant 0 : index
    %32 = vector.load %arg6[%c0_17, %c0_18, %c0_19] : memref<1x64x512xf32, #tpu.memory_space<vmem>>, vector<1x64x512xf32>
    %33 = vector.shape_cast %32 : vector<1x64x512xf32> to vector<64x512xf32>
    %34 = vector.shape_cast %31 : vector<64x512xf32> to vector<1x64x512xf32>
    tpu.vector_store %arg6[%c0_17, %c0_18, %c0_19], %34 {strides = array<i32>} : memref<1x64x512xf32, #tpu.memory_space<vmem>>, vector<1x64x512xf32>,
    return
  }
  func.func @transform_0(%arg0: i32, %arg1: i32) -> (i32, i32, i32) {
    %c0_i32 = arith.constant 0 : i32
    %c0_i32_0 = arith.constant 0 : i32
    return %arg0, %c0_i32, %arg1 : i32, i32, i32
  }
  func.func @transform_1(%arg0: i32, %arg1: i32) -> (i32, i32, i32) {
    %c0_i32 = arith.constant 0 : i32
    %c0_i32_0 = arith.constant 0 : i32
    return %arg0, %c0_i32, %arg1 : i32, i32, i32
  }
  func.func @transform_2(%arg0: i32, %arg1: i32) -> (i32, i32) {
    %c0_i32 = arith.constant 0 : i32
    %c0_i32_0 = arith.constant 0 : i32
    %c0_i32_1 = arith.constant 0 : i32
    return %c0_i32, %c0_i32_0 : i32, i32
  }
  func.func @transform_3(%arg0: i32, %arg1: i32) -> (i32, i32) {
    %c0_i32 = arith.constant 0 : i32
    %c0_i32_0 = arith.constant 0 : i32
    %c0_i32_1 = arith.constant 0 : i32
    return %c0_i32, %c0_i32_0 : i32, i32
  }
  func.func @transform_4(%arg0: i32, %arg1: i32) -> (i32, i32, i32) {
    %c0_i32 = arith.constant 0 : i32
    %c0_i32_0 = arith.constant 0 : i32
    return %arg0, %c0_i32, %arg1 : i32, i32, i32
  }
}

</mosaic_0001>

<llo_original>
// kernel: tpu_custom_call.1
$region0: #{tpu_custom_call.1}
  #allocation0 [shape = 'u32[]', space=smem, size = 0x4, offset = 0x4, fixed_abs, tag = 'smem constant byte address 0x4 - core index']
  #allocation1 [shape = 'u32[144,128]{1,0:T(1,128)}', space=vmem, size = 0x12000, scoped, tag = 'internal scratch']
  %s0 = inlined_call_operand.vmem [shape: f32[2,64,512], index: 0, kind: input, shape index: {}]
  %s1 = inlined_call_operand.vmem [shape: f32[2,3,512], index: 1, kind: input, shape index: {}]
  %s2 = inlined_call_operand.vmem [shape: f32[192,64], index: 2, kind: input, shape index: {}]
  %s3 = inlined_call_operand.vmem [shape: f32[128,8], index: 3, kind: input, shape index: {}]
  %s4 = inlined_call_operand.hbm [shape: f32[2,64,512], index: 4, kind: output, shape index: {}]
  %s5 = sld [smem:[#allocation0]]
  $region49: #{tpu_custom_call.1} parent=0
    _
  %s7 = ssub.s32 1, %s5
  %s8 = scalar_select 0, %s7, %s5
  $region1: #{tpu_custom_call.1} parent=0
    #allocation2 [shape = 'u8[262144]{0}', space=vmem, size = 0x40000, scoped, tag = 'output window, operand 0']
    #allocation3 [shape = 's32[2]{0}', space=sflag, size = 0x8, scoped, tag = 'scoped memory for tpu_custom_call.1']
    %9 = vsyncpa [#allocation3], 0
    %s10 = scalar_lea.sflag [#allocation3], 1
    %11 = vsyncpa %s10, 0
    loop: start=0, step=1, limit=4
    $region2: #{tpu_custom_call.1} parent=1 // loop_pre_header
      _
    $region3: #{tpu_custom_call.1} parent=1 // loop_header
      %s13 = sphi 0, %s17
      %p14 = scmp.ge.s32.totalorder %s13, 4
      %s20 = sphi 0, %s32
      %s21 = sphi 0, %s28
      %s22 = sphi 0, %s20
      %s23 = sphi 0, %s21
      %s24 = sphi 0, %s22
      %s25 = sphi 0, %s23
      %s37 = sphi 0, %s39
      %s40 = sphi 0, %s37
      %s41 = sphi 0, %s40
      %s57 = sphi 0, %s41
      %s65 = sphi 0, %s67
      %s68 = sphi 0, %s65
      %s69 = sphi 0, %s68
      %s85 = sphi 0, %s69
      %s89 = sphi 0, %s89
      %s91 = sphi 0, %s89
      %s92 = sphi 0, %s91
      %s106 = sphi 0, %s92
      %s110 = sphi 0, %s110
      %s112 = sphi 0, %s110
      %s113 = sphi 0, %s112
      %s127 = sphi 0, %s113
      %s135 = sphi 0, %s137
      %s138 = sphi 0, %s135
      %s139 = sphi 0, %s138
      %s155 = sphi 0, %s139
    $region4: #{tpu_custom_call.1} parent=1 // loop_header_branch
      %16 = sbr.rel (%p14) target = $region8
    $region5: #{tpu_custom_call.1} parent=1 // loop_body
      %s18 = ssub.s32 %s13, 1
      %s19 = ssub.s32 %s13, 2
      %s26 = sadd.s32 1, %s21
      %p27 = scmp.ge.s32.totalorder %s26, 1
      %s28 = scalar_select %p27, 0, %s26
      %s29 = sadd.s32 1, %s20
      %s30 = scalar_select %p27, %s29, %s20
      %p31 = scmp.ge.s32.totalorder %s30, 2
      %s32 = scalar_select %p31, 0, %s30
      %s33 = ssub.s32 %s20, %s32
      %s34 = ssub.s32 %s21, %s28
      %s35 = sor.u32 %s33, %s34
      %p36 = scmp.eq.s32.totalorder %s35, 0
      %s38 = sadd.s32 %s37, 1
      %s39 = scalar_select %p36, %s37, %s38
      %p42 = pneg %p36
      %p43 = scmp.eq.s32.totalorder %s13, 1
      %p44 = por %p42, %p43
      %p45 = scmp.ne.s32.totalorder %s37, %s40
      %p46 = scmp.eq.s32.totalorder %s13, 0
      %p47 = por %p45, %p46
      %p48 = scmp.ne.s32.totalorder %s37, %s40
      %p49 = scmp.eq.s32.totalorder %s18, 1
      %p50 = por %p48, %p49
      %p51 = scmp.ne.s32.totalorder %s40, %s41
      %p52 = scmp.eq.s32.totalorder %s18, 0
      %p53 = por %p51, %p52
      %p54 = scmp.ne.s32.totalorder %s40, %s41
      %p55 = scmp.eq.s32.totalorder %s19, 1
      %p56 = por %p54, %p55
      %p58 = scmp.ne.s32.totalorder %s41, %s57
      %p59 = scmp.eq.s32.totalorder %s19, 0
      %p60 = por %p58, %p59
      %s61 = ssub.s32 %s20, %s32
      %s62 = ssub.s32 %s21, %s28
      %s63 = sor.u32 %s61, %s62
      %p64 = scmp.eq.s32.totalorder %s63, 0
      %s66 = sadd.s32 %s65, 1
      %s67 = scalar_select %p64, %s65, %s66
      %p70 = pneg %p64
      %p71 = scmp.eq.s32.totalorder %s13, 1
      %p72 = por %p70, %p71
      %p73 = scmp.ne.s32.totalorder %s65, %s68
      %p74 = scmp.eq.s32.totalorder %s13, 0
      %p75 = por %p73, %p74
      %p76 = scmp.ne.s32.totalorder %s65, %s68
      %p77 = scmp.eq.s32.totalorder %s18, 1
      %p78 = por %p76, %p77
      %p79 = scmp.ne.s32.totalorder %s68, %s69
      %p80 = scmp.eq.s32.totalorder %s18, 0
      %p81 = por %p79, %p80
      %p82 = scmp.ne.s32.totalorder %s68, %s69
      %p83 = scmp.eq.s32.totalorder %s19, 1
      %p84 = por %p82, %p83
      %p86 = scmp.ne.s32.totalorder %s69, %s85
      %p87 = scmp.eq.s32.totalorder %s19, 0
      %p88 = por %p86, %p87
      %s90 = sadd.s32 %s89, 1
      %p93 = scmp.eq.s32.totalorder %s13, 1
      %p94 = scmp.ne.s32.totalorder %s89, %s91
      %p95 = scmp.eq.s32.totalorder %s13, 0
      %p96 = por %p94, %p95
      %p97 = scmp.ne.s32.totalorder %s89, %s91
      %p98 = scmp.eq.s32.totalorder %s18, 1
      %p99 = por %p97, %p98
      %p100 = scmp.ne.s32.totalorder %s91, %s92
      %p101 = scmp.eq.s32.totalorder %s18, 0
      %p102 = por %p100, %p101
      %p103 = scmp.ne.s32.totalorder %s91, %s92
      %p104 = scmp.eq.s32.totalorder %s19, 1
      %p105 = por %p103, %p104
      %p107 = scmp.ne.s32.totalorder %s92, %s106
      %p108 = scmp.eq.s32.totalorder %s19, 0
      %p109 = por %p107, %p108
      %s111 = sadd.s32 %s110, 1
      %p114 = scmp.eq.s32.totalorder %s13, 1
      %p115 = scmp.ne.s32.totalorder %s110, %s112
      %p116 = scmp.eq.s32.totalorder %s13, 0
      %p117 = por %p115, %p116
      %p118 = scmp.ne.s32.totalorder %s110, %s112
      %p119 = scmp.eq.s32.totalorder %s18, 1
      %p120 = por %p118, %p119
      %p121 = scmp.ne.s32.totalorder %s112, %s113
      %p122 = scmp.eq.s32.totalorder %s18, 0
      %p123 = por %p121, %p122
      %p124 = scmp.ne.s32.totalorder %s112, %s113
      %p125 = scmp.eq.s32.totalorder %s19, 1
      %p126 = por %p124, %p125
      %p128 = scmp.ne.s32.totalorder %s113, %s127
      %p129 = scmp.eq.s32.totalorder %s19, 0
      %p130 = por %p128, %p129
      %s131 = ssub.s32 %s20, %s32
      %s132 = ssub.s32 %s21, %s28
      %s133 = sor.u32 %s131, %s132
      %p134 = scmp.eq.s32.totalorder %s133, 0
      %s136 = sadd.s32 %s135, 1
      %s137 = scalar_select %p134, %s135, %s136
      %p140 = pneg %p134
      %p141 = scmp.eq.s32.totalorder %s13, 1
      %p142 = por %p140, %p141
      %p143 = scmp.ne.s32.totalorder %s135, %s138
      %p144 = scmp.eq.s32.totalorder %s13, 0
      %p145 = por %p143, %p144
      %p146 = scmp.ne.s32.totalorder %s135, %s138
      %p147 = scmp.eq.s32.totalorder %s18, 1
      %p148 = por %p146, %p147
      %p149 = scmp.ne.s32.totalorder %s138, %s139
      %p150 = scmp.eq.s32.totalorder %s18, 0
      %p151 = por %p149, %p150
      %p152 = scmp.ne.s32.totalorder %s138, %s139
      %p153 = scmp.eq.s32.totalorder %s19, 1
      %p154 = por %p152, %p153
      %p156 = scmp.ne.s32.totalorder %s139, %s155
      %p157 = scmp.eq.s32.totalorder %s19, 0
      %p158 = por %p156, %p157
      %p159 = scmp.le.s32.totalorder 1, %s13
      %p160 = scmp.lt.s32.totalorder %s13, 3
      %p161 = pnand %p159, %p160
      %p162 = pneg %p161
      // Predicated region
      $region9: #{tpu_custom_call.1} parent=5 // pred_check
        _
      $region10: #{tpu_custom_call.1} parent=5 // pred_check_branch
        %164 = sbr.rel (%p161) target = $region12
      $region11: #{tpu_custom_call.1} parent=5 // pred_region
        %s165 = ssub.s32 %s13, 1
        // Predicated region
        $region13: #{tpu_custom_call.1} parent=11 // pred_check
          %p166 = pneg %p102
        $region14: #{tpu_custom_call.1} parent=11 // pred_check_branch
          %168 = sbr.rel (%p166) target = $region16
        $region15: #{tpu_custom_call.1} parent=11 // pred_region
          _
        $region16: #{tpu_custom_call.1} parent=11 // pred_fallthru
          _
        // Predicated region
        $region17: #{tpu_custom_call.1} parent=11 // pred_check
          %p169 = pneg %p123
        $region18: #{tpu_custom_call.1} parent=11 // pred_check_branch
          %171 = sbr.rel (%p169) target = $region20
        $region19: #{tpu_custom_call.1} parent=11 // pred_region
          _
        $region20: #{tpu_custom_call.1} parent=11 // pred_fallthru
          _
      $region12: #{tpu_custom_call.1} parent=5 // pred_fallthru
        _
      %p172 = scmp.lt.s32.totalorder %s13, 2
      // Predicated region
      $region21: #{tpu_custom_call.1} parent=5 // pred_check
        %p173 = pneg %p172
      $region22: #{tpu_custom_call.1} parent=5 // pred_check_branch
        %175 = sbr.rel (%p173) target = $region24
      $region23: #{tpu_custom_call.1} parent=5 // pred_region
        // Predicated region
        $region25: #{tpu_custom_call.1} parent=23 // pred_check
          %p176 = pneg %p47
        $region26: #{tpu_custom_call.1} parent=23 // pred_check_branch
          %178 = sbr.rel (%p176) target = $region28
        $region27: #{tpu_custom_call.1} parent=23 // pred_region
          %s179 = smul.u32 4, %s21
          %p180 = scmp.lt.s32.totalorder %s20, 1
          %s181 = scalar_select %p180, %s20, 1
          %p182 = scmp.lt.s32.totalorder %s179, 3
          %s183 = scalar_select %p182, %s179, 3
          %s184 = smul.addr %s181, 32
          %s185 = sadd.s32 %s183, %s184
          %s186 = smul.addr %s185, 8
          %s187 = scalar_lea.vmem %s0, %s186
          %s188 = smul.u32 4, %s21
        $region28: #{tpu_custom_call.1} parent=23 // pred_fallthru
          _
        // Predicated region
        $region29: #{tpu_custom_call.1} parent=23 // pred_check
          %p189 = pneg %p75
        $region30: #{tpu_custom_call.1} parent=23 // pred_check_branch
          %191 = sbr.rel (%p189) target = $region32
        $region31: #{tpu_custom_call.1} parent=23 // pred_region
          %s192 = smul.u32 4, %s21
          %p193 = scmp.lt.s32.totalorder %s20, 1
          %s194 = scalar_select %p193, %s20, 1
          %p195 = scmp.lt.s32.totalorder %s192, 3
          %s196 = scalar_select %p195, %s192, 3
          %s197 = smul.addr %s194, 4
          %s198 = sadd.s32 %s196, %s197
          %s199 = smul.addr %s198, 4
          %s200 = scalar_lea.vmem %s1, %s199
          %s201 = smul.u32 4, %s21
        $region32: #{tpu_custom_call.1} parent=23 // pred_fallthru
          _
      $region24: #{tpu_custom_call.1} parent=5 // pred_fallthru
        _
      %p202 = scmp.le.s32.totalorder 1, %s13
      %p203 = scmp.lt.s32.totalorder %s13, 3
      %p204 = pnand %p202, %p203
      %p205 = pneg %p204
      // Predicated region
      $region33: #{tpu_custom_call.1} parent=5 // pred_check
        _
      $region34: #{tpu_custom_call.1} parent=5 // pred_check_branch
        %207 = sbr.rel (%p204) target = $region36
      $region35: #{tpu_custom_call.1} parent=5 // pred_region
        %s208 = ssub.s32 %s13, 1
        %s209 = smul.u32 4, %s23
        %p210 = scmp.lt.s32.totalorder %s22, 1
        %s211 = scalar_select %p210, %s22, 1
        %p212 = scmp.lt.s32.totalorder %s209, 3
        %s213 = scalar_select %p212, %s209, 3
        %s214 = smul.addr %s211, 32
        %s215 = sadd.s32 %s213, %s214
        %s216 = smul.addr %s215, 8
        %s217 = scalar_lea.vmem %s0, %s216
        %p218 = pneg %p53
        %p219 = pneg %p50
        %s220 = smul.u32 4, %s23
        %p221 = scmp.lt.s32.totalorder %s22, 1
        %s222 = scalar_select %p221, %s22, 1
        %p223 = scmp.lt.s32.totalorder %s220, 3
        %s224 = scalar_select %p223, %s220, 3
        %s225 = smul.addr %s222, 4
        %s226 = sadd.s32 %s224, %s225
        %s227 = smul.addr %s226, 4
        %s228 = scalar_lea.vmem %s1, %s227
        %p229 = pneg %p81
        %p230 = pneg %p78
        %p231 = pneg %p102
        %p232 = pneg %p99
        %p233 = pneg %p123
        %p234 = pneg %p120
        %p235 = pneg %p151
        %p236 = pneg %p148
        %s237 = sand.u32 %s138, 1
        %s238 = scalar_lea.sflag [#allocation3], %s237
        %s239 = sand.u32 %s138, 1
        %s240 = smul.addr %s239, 256
        %s241 = scalar_lea.vmem [#allocation2], %s240
        %s242 = smul.u32 4, %s23
        %p243 = scmp.lt.s32.totalorder %s22, 1
        %s244 = scalar_select %p243, %s22, 1
        %p245 = scmp.lt.s32.totalorder %s242, 3
        %s246 = scalar_select %p245, %s242, 3
        %s247 = smul.addr %s244, 32
        %s248 = sadd.s32 %s246, %s247
        %s249 = smul.addr %s248, 8
        %s250 = scalar_lea.vmem %s0, %s249
        %s251 = smul.u32 4, %s23
        %s252 = smul.u32 4, %s23
        %p253 = scmp.lt.s32.totalorder %s22, 1
        %s254 = scalar_select %p253, %s22, 1
        %p255 = scmp.lt.s32.totalorder %s252, 3
        %s256 = scalar_select %p255, %s252, 3
        %s257 = smul.addr %s254, 4
        %s258 = sadd.s32 %s256, %s257
        %s259 = smul.addr %s258, 4
        %s260 = scalar_lea.vmem %s1, %s259
        %s261 = smul.u32 4, %s23
        %s262 = smul.u32 4, %s23
        %v263 = vld [vmem:[%s250] sm:$0xff]
        %v264 = vld [vmem:[%s250 + $0x8] sm:$0xff]
        %v265 = vld [vmem:[%s250 + $0x10] sm:$0xff]
        %v266 = vld [vmem:[%s250 + $0x18] sm:$0xff]
        %v267 = vld [vmem:[%s250 + $0x20] sm:$0xff]
        %v268 = vld [vmem:[%s250 + $0x28] sm:$0xff]
        %v269 = vld [vmem:[%s250 + $0x30] sm:$0xff]
        %v270 = vld [vmem:[%s250 + $0x38] sm:$0xff]
        %v271 = vld [vmem:[%s250 + $0x40] sm:$0xff]
        %v272 = vld [vmem:[%s250 + $0x48] sm:$0xff]
        %v273 = vld [vmem:[%s250 + $0x50] sm:$0xff]
        %v274 = vld [vmem:[%s250 + $0x58] sm:$0xff]
        %v275 = vld [vmem:[%s250 + $0x60] sm:$0xff]
        %v276 = vld [vmem:[%s250 + $0x68] sm:$0xff]
        %v277 = vld [vmem:[%s250 + $0x70] sm:$0xff]
        %v278 = vld [vmem:[%s250 + $0x78] sm:$0xff]
        %v279 = vld [vmem:[%s250 + $0x80] sm:$0xff]
        %v280 = vld [vmem:[%s250 + $0x88] sm:$0xff]
        %v281 = vld [vmem:[%s250 + $0x90] sm:$0xff]
        %v282 = vld [vmem:[%s250 + $0x98] sm:$0xff]
        %v283 = vld [vmem:[%s250 + $0xa0] sm:$0xff]
        %v284 = vld [vmem:[%s250 + $0xa8] sm:$0xff]
        %v285 = vld [vmem:[%s250 + $0xb0] sm:$0xff]
        %v286 = vld [vmem:[%s250 + $0xb8] sm:$0xff]
        %v287 = vld [vmem:[%s250 + $0xc0] sm:$0xff]
        %v288 = vld [vmem:[%s250 + $0xc8] sm:$0xff]
        %v289 = vld [vmem:[%s250 + $0xd0] sm:$0xff]
        %v290 = vld [vmem:[%s250 + $0xd8] sm:$0xff]
        %v291 = vld [vmem:[%s250 + $0xe0] sm:$0xff]
        %v292 = vld [vmem:[%s250 + $0xe8] sm:$0xff]
        %v293 = vld [vmem:[%s250 + $0xf0] sm:$0xff]
        %v294 = vld [vmem:[%s250 + $0xf8] sm:$0xff]
        %v295 = vld [vmem:[%s260] sm:$0x77]
        %v296 = vld [vmem:[%s260 + $0x8] sm:$0x77]
        %v297 = vld [vmem:[%s2] sm:$0xff]
        %v298 = vld [vmem:[%s2 + $0x8] sm:$0xff]
        %v299 = vld [vmem:[%s2 + $0x10] sm:$0xff]
        %v300 = vld [vmem:[%s2 + $0x18] sm:$0xff]
        %v301 = vld [vmem:[%s2 + $0x20] sm:$0xff]
        %v302 = vld [vmem:[%s2 + $0x28] sm:$0xff]
        %v303 = vld [vmem:[%s2 + $0x30] sm:$0xff]
        %v304 = vld [vmem:[%s2 + $0x38] sm:$0xff]
        %v305 = vld [vmem:[%s2 + $0x40] sm:$0xff]
        %v306 = vld [vmem:[%s2 + $0x48] sm:$0xff]
        %v307 = vld [vmem:[%s2 + $0x50] sm:$0xff]
        %v308 = vld [vmem:[%s2 + $0x58] sm:$0xff]
        %v309 = vld [vmem:[%s2 + $0x60] sm:$0xff]
        %v310 = vld [vmem:[%s2 + $0x68] sm:$0xff]
        %v311 = vld [vmem:[%s2 + $0x70] sm:$0xff]
        %v312 = vld [vmem:[%s2 + $0x78] sm:$0xff]
        %v313 = vld [vmem:[%s2 + $0x80] sm:$0xff]
        %v314 = vld [vmem:[%s2 + $0x88] sm:$0xff]
        %v315 = vld [vmem:[%s2 + $0x90] sm:$0xff]
        %v316 = vld [vmem:[%s2 + $0x98] sm:$0xff]
        %v317 = vld [vmem:[%s2 + $0xa0] sm:$0xff]
        %v318 = vld [vmem:[%s2 + $0xa8] sm:$0xff]
        %v319 = vld [vmem:[%s2 + $0xb0] sm:$0xff]
        %v320 = vld [vmem:[%s2 + $0xb8] sm:$0xff]
        %v321 = vld [vmem:[%s3] sm:$0xff]
        %v322 = vld [vmem:[%s3 + $0x8] sm:$0xff]
        %v323 = vld [vmem:[%s3 + $0x10] sm:$0xff]
        %v324 = vld [vmem:[%s3 + $0x18] sm:$0xff]
        %v325 = vld [vmem:[%s3 + $0x20] sm:$0xff]
        %v326 = vld [vmem:[%s3 + $0x28] sm:$0xff]
        %v327 = vld [vmem:[%s3 + $0x30] sm:$0xff]
        %v328 = vld [vmem:[%s3 + $0x38] sm:$0xff]
        %v329 = vld [vmem:[%s3 + $0x40] sm:$0xff]
        %v330 = vld [vmem:[%s3 + $0x48] sm:$0xff]
        %v331 = vld [vmem:[%s3 + $0x50] sm:$0xff]
        %v332 = vld [vmem:[%s3 + $0x58] sm:$0xff]
        %v333 = vld [vmem:[%s3 + $0x60] sm:$0xff]
        %v334 = vld [vmem:[%s3 + $0x68] sm:$0xff]
        %v335 = vld [vmem:[%s3 + $0x70] sm:$0xff]
        %v336 = vld [vmem:[%s3 + $0x78] sm:$0xff]
        %338 = vset.pattern.permute.xlu0 3
        %339 = vperm.xlu0 %338, %v321
        %v340 = vpop.permute.xlu0 %339
        %343 = vset.pattern.permute.xlu0 3
        %344 = vperm.xlu0 %343, %v322
        %v345 = vpop.permute.xlu0 %344
        %348 = vset.pattern.permute.xlu0 3
        %349 = vperm.xlu0 %348, %v323
        %v350 = vpop.permute.xlu0 %349
        %353 = vset.pattern.permute.xlu0 3
        %354 = vperm.xlu0 %353, %v324
        %v355 = vpop.permute.xlu0 %354
        %358 = vset.pattern.permute.xlu0 3
        %359 = vperm.xlu0 %358, %v325
        %v360 = vpop.permute.xlu0 %359
        %363 = vset.pattern.permute.xlu0 3
        %364 = vperm.xlu0 %363, %v326
        %v365 = vpop.permute.xlu0 %364
        %368 = vset.pattern.permute.xlu0 3
        %369 = vperm.xlu0 %368, %v327
        %v370 = vpop.permute.xlu0 %369
        %373 = vset.pattern.permute.xlu0 3
        %374 = vperm.xlu0 %373, %v328
        %v375 = vpop.permute.xlu0 %374
        %vm377 = vcmask 523264
        %v379 = vsel %vm377, %v297, 0
        %v382 = vsel %vm377, %v298, 0
        %v385 = vsel %vm377, %v299, 0
        %v388 = vsel %vm377, %v300, 0
        %v391 = vsel %vm377, %v301, 0
        %v394 = vsel %vm377, %v302, 0
        %v397 = vsel %vm377, %v303, 0
        %v400 = vsel %vm377, %v304, 0
        %402 = vmatprep.subr.mxu0 0.0
        %403 = vmatpush1.msra.mxu0 0.0
        %404 = vmatprep.subr.mxu0 0.0
        %405 = vmatpush1.msra.mxu0 0.0
        %406 = vmatprep.subr.mxu0 0.0
        %407 = vmatpush1.msra.mxu0 0.0
        %408 = vmatprep.subr.mxu0 0.0
        %409 = vmatpush1.msra.mxu0 0.0
        %410 = vmatprep.subr.mxu0 0.0
        %411 = vmatpush1.msra.mxu0 0.0
        %412 = vmatprep.subr.mxu0 0.0
        %413 = vmatpush1.msra.mxu0 0.0
        %414 = vmatprep.subr.mxu0 0.0
        %415 = vmatpush1.msra.mxu0 0.0
        %416 = vmatprep.subr.mxu0 0.0
        %417 = vmatpush1.msra.mxu0 0.0
        %418 = vmatprep.subr.mxu0 %v292
        %419 = vmatpush1.msra.mxu0 %v291
        %420 = vmatprep.subr.mxu0 %v288
        %421 = vmatpush1.msra.mxu0 %v287
        %422 = vmatprep.subr.mxu0 %v284
        %423 = vmatpush1.msra.mxu0 %v283
        %424 = vmatprep.subr.mxu0 %v280
        %425 = vmatpush1.msra.mxu0 %v279
        %426 = vmatprep.subr.mxu0 %v276
        %427 = vmatpush1.msra.mxu0 %v275
        %428 = vmatprep.subr.mxu0 %v272
        %429 = vmatpush1.msra.mxu0 %v271
        %430 = vmatprep.subr.mxu0 %v268
        %431 = vmatpush1.msra.mxu0 %v267
        %432 = vmatprep.subr.mxu0 %v264
        %433 = vmatpush1.msra.mxu0 %v263
        %434 = vmatprep.subr.mxu0 0.0
        %435 = vmatpush2.msra.mxu0 0.0
        %436 = vmatprep.subr.mxu0 0.0
        %437 = vmatpush2.msra.mxu0 0.0
        %438 = vmatprep.subr.mxu0 0.0
        %439 = vmatpush2.msra.mxu0 0.0
        %440 = vmatprep.subr.mxu0 0.0
        %441 = vmatpush2.msra.mxu0 0.0
        %442 = vmatprep.subr.mxu0 0.0
        %443 = vmatpush2.msra.mxu0 0.0
        %444 = vmatprep.subr.mxu0 0.0
        %445 = vmatpush2.msra.mxu0 0.0
        %446 = vmatprep.subr.mxu0 0.0
        %447 = vmatpush2.msra.mxu0 0.0
        %448 = vmatprep.subr.mxu0 0.0
        %449 = vmatpush2.msra.mxu0 0.0
        %450 = vmatprep.subr.mxu0 0.0
        %451 = vmatpush2.msra.mxu0 0.0
        %452 = vmatprep.subr.mxu0 0.0
        %453 = vmatpush2.msra.mxu0 0.0
        %454 = vmatprep.subr.mxu0 0.0
        %455 = vmatpush2.msra.mxu0 0.0
        %456 = vmatprep.subr.mxu0 0.0
        %457 = vmatpush2.msra.mxu0 0.0
        %458 = vmatprep.subr.mxu0 0.0
        %459 = vmatpush2.msra.mxu0 0.0
        %460 = vmatprep.subr.mxu0 0.0
        %461 = vmatpush2.msra.mxu0 0.0
        %462 = vmatprep.subr.mxu0 0.0
        %463 = vmatpush2.msra.mxu0 0.0
        %464 = vmatprep.subr.mxu0 0.0
        %465 = vmatpush2.msra.mxu0 0.0
        %466 = vmatprep.mubr.f32.mxu0 0.0
        %467 = vmatmul.mubr.f32.gmra.mxu0 %v379
        %v468 = vpop.f32.mrf.mxu0
        %v469 = vadd.f32 %v340, %v468
        %v470 = vpop.f32.mrf.mxu0
        %v471 = vadd.f32 %v340, %v470
        %472 = vmatprep.mubr.f32.mxu0 0.0
        %473 = vmatmul.mubr.f32.gmra.mxu0 %v382
        %v474 = vpop.f32.mrf.mxu0
        %v475 = vadd.f32 %v345, %v474
        %v476 = vpop.f32.mrf.mxu0
        %v477 = vadd.f32 %v345, %v476
        %478 = vmatprep.mubr.f32.mxu0 0.0
        %479 = vmatmul.mubr.f32.gmra.mxu0 %v385
        %v480 = vpop.f32.mrf.mxu0
        %v481 = vadd.f32 %v350, %v480
        %v482 = vpop.f32.mrf.mxu0
        %v483 = vadd.f32 %v350, %v482
        %484 = vmatprep.mubr.f32.mxu0 0.0
        %485 = vmatmul.mubr.f32.gmra.mxu0 %v388
        %v486 = vpop.f32.mrf.mxu0
        %v487 = vadd.f32 %v355, %v486
        %v488 = vpop.f32.mrf.mxu0
        %v489 = vadd.f32 %v355, %v488
        %490 = vmatprep.mubr.f32.mxu0 0.0
        %491 = vmatmul.mubr.f32.gmra.mxu0 %v391
        %v492 = vpop.f32.mrf.mxu0
        %v493 = vadd.f32 %v360, %v492
        %v494 = vpop.f32.mrf.mxu0
        %v495 = vadd.f32 %v360, %v494
        %496 = vmatprep.mubr.f32.mxu0 0.0
        %497 = vmatmul.mubr.f32.gmra.mxu0 %v394
        %v498 = vpop.f32.mrf.mxu0
        %v499 = vadd.f32 %v365, %v498
        %v500 = vpop.f32.mrf.mxu0
        %v501 = vadd.f32 %v365, %v500
        %502 = vmatprep.mubr.f32.mxu0 0.0
        %503 = vmatmul.mubr.f32.gmra.mxu0 %v397
        %v504 = vpop.f32.mrf.mxu0
        %v505 = vadd.f32 %v370, %v504
        %v506 = vpop.f32.mrf.mxu0
        %v507 = vadd.f32 %v370, %v506
        %508 = vmatprep.mubr.f32.mxu0 0.0
        %509 = vmatmul.mubr.f32.gmra.mxu0 %v400
        %v510 = vpop.f32.mrf.mxu0
        %v511 = vadd.f32 %v375, %v510
        %v512 = vpop.f32.mrf.mxu0
        %v513 = vadd.f32 %v375, %v512
        %514 = vdwg.mxu0
        %515 = vmatprep.subr.mxu0 0.0
        %516 = vmatpush1.msra.mxu0 0.0
        %517 = vmatprep.subr.mxu0 0.0
        %518 = vmatpush1.msra.mxu0 0.0
        %519 = vmatprep.subr.mxu0 0.0
        %520 = vmatpush1.msra.mxu0 0.0
        %521 = vmatprep.subr.mxu0 0.0
        %522 = vmatpush1.msra.mxu0 0.0
        %523 = vmatprep.subr.mxu0 0.0
        %524 = vmatpush1.msra.mxu0 0.0
        %525 = vmatprep.subr.mxu0 0.0
        %526 = vmatpush1.msra.mxu0 0.0
        %527 = vmatprep.subr.mxu0 0.0
        %528 = vmatpush1.msra.mxu0 0.0
        %529 = vmatprep.subr.mxu0 0.0
        %530 = vmatpush1.msra.mxu0 0.0
        %531 = vmatprep.subr.mxu0 %v294
        %532 = vmatpush1.msra.mxu0 %v293
        %533 = vmatprep.subr.mxu0 %v290
        %534 = vmatpush1.msra.mxu0 %v289
        %535 = vmatprep.subr.mxu0 %v286
        %536 = vmatpush1.msra.mxu0 %v285
        %537 = vmatprep.subr.mxu0 %v282
        %538 = vmatpush1.msra.mxu0 %v281
        %539 = vmatprep.subr.mxu0 %v278
        %540 = vmatpush1.msra.mxu0 %v277
        %541 = vmatprep.subr.mxu0 %v274
        %542 = vmatpush1.msra.mxu0 %v273
        %543 = vmatprep.subr.mxu0 %v270
        %544 = vmatpush1.msra.mxu0 %v269
        %545 = vmatprep.subr.mxu0 %v266
        %546 = vmatpush1.msra.mxu0 %v265
        %547 = vmatprep.subr.mxu0 0.0
        %548 = vmatpush2.msra.mxu0 0.0
        %549 = vmatprep.subr.mxu0 0.0
        %550 = vmatpush2.msra.mxu0 0.0
        %551 = vmatprep.subr.mxu0 0.0
        %552 = vmatpush2.msra.mxu0 0.0
        %553 = vmatprep.subr.mxu0 0.0
        %554 = vmatpush2.msra.mxu0 0.0
        %555 = vmatprep.subr.mxu0 0.0
        %556 = vmatpush2.msra.mxu0 0.0
        %557 = vmatprep.subr.mxu0 0.0
        %558 = vmatpush2.msra.mxu0 0.0
        %559 = vmatprep.subr.mxu0 0.0
        %560 = vmatpush2.msra.mxu0 0.0
        %561 = vmatprep.subr.mxu0 0.0
        %562 = vmatpush2.msra.mxu0 0.0
        %563 = vmatprep.subr.mxu0 0.0
        %564 = vmatpush2.msra.mxu0 0.0
        %565 = vmatprep.subr.mxu0 0.0
        %566 = vmatpush2.msra.mxu0 0.0
        %567 = vmatprep.subr.mxu0 0.0
        %568 = vmatpush2.msra.mxu0 0.0
        %569 = vmatprep.subr.mxu0 0.0
        %570 = vmatpush2.msra.mxu0 0.0
        %571 = vmatprep.subr.mxu0 0.0
        %572 = vmatpush2.msra.mxu0 0.0
        %573 = vmatprep.subr.mxu0 0.0
        %574 = vmatpush2.msra.mxu0 0.0
        %575 = vmatprep.subr.mxu0 0.0
        %576 = vmatpush2.msra.mxu0 0.0
        %577 = vmatprep.subr.mxu0 0.0
        %578 = vmatpush2.msra.mxu0 0.0
        %579 = vmatprep.mubr.f32.mxu0 0.0
        %580 = vmatmul.mubr.f32.gmra.mxu0 %v379
        %v581 = vpop.f32.mrf.mxu0
        %v582 = vadd.f32 %v340, %v581
        %v583 = vpop.f32.mrf.mxu0
        %v584 = vadd.f32 %v340, %v583
        %585 = vmatprep.mubr.f32.mxu0 0.0
        %586 = vmatmul.mubr.f32.gmra.mxu0 %v382
        %v587 = vpop.f32.mrf.mxu0
        %v588 = vadd.f32 %v345, %v587
        %v589 = vpop.f32.mrf.mxu0
        %v590 = vadd.f32 %v345, %v589
        %591 = vmatprep.mubr.f32.mxu0 0.0
        %592 = vmatmul.mubr.f32.gmra.mxu0 %v385
        %v593 = vpop.f32.mrf.mxu0
        %v594 = vadd.f32 %v350, %v593
        %v595 = vpop.f32.mrf.mxu0
        %v596 = vadd.f32 %v350, %v595
        %597 = vmatprep.mubr.f32.mxu0 0.0
        %598 = vmatmul.mubr.f32.gmra.mxu0 %v388
        %v599 = vpop.f32.mrf.mxu0
        %v600 = vadd.f32 %v355, %v599
        %v601 = vpop.f32.mrf.mxu0
        %v602 = vadd.f32 %v355, %v601
        %603 = vmatprep.mubr.f32.mxu0 0.0
        %604 = vmatmul.mubr.f32.gmra.mxu0 %v391
        %v605 = vpop.f32.mrf.mxu0
        %v606 = vadd.f32 %v360, %v605
        %v607 = vpop.f32.mrf.mxu0
        %v608 = vadd.f32 %v360, %v607
        %609 = vmatprep.mubr.f32.mxu0 0.0
        %610 = vmatmul.mubr.f32.gmra.mxu0 %v394
        %v611 = vpop.f32.mrf.mxu0
        %v612 = vadd.f32 %v365, %v611
        %v613 = vpop.f32.mrf.mxu0
        %v614 = vadd.f32 %v365, %v613
        %615 = vmatprep.mubr.f32.mxu0 0.0
        %616 = vmatmul.mubr.f32.gmra.mxu0 %v397
        %v617 = vpop.f32.mrf.mxu0
        %v618 = vadd.f32 %v370, %v617
        %v619 = vpop.f32.mrf.mxu0
        %v620 = vadd.f32 %v370, %v619
        %621 = vmatprep.mubr.f32.mxu0 0.0
        %622 = vmatmul.mubr.f32.gmra.mxu0 %v400
        %v623 = vpop.f32.mrf.mxu0
        %v624 = vadd.f32 %v375, %v623
        %v625 = vpop.f32.mrf.mxu0
        %v626 = vadd.f32 %v375, %v625
        %627 = vdwg.mxu0
        %v628 = vmax.f32 %v469, 0.0
        %v629 = vmax.f32 %v471, 0.0
        %v630 = vmax.f32 %v582, 0.0
        %v631 = vmax.f32 %v584, 0.0
        %v632 = vmax.f32 %v475, 0.0
        %v633 = vmax.f32 %v477, 0.0
        %v634 = vmax.f32 %v588, 0.0
        %v635 = vmax.f32 %v590, 0.0
        %v636 = vmax.f32 %v481, 0.0
        %v637 = vmax.f32 %v483, 0.0
        %v638 = vmax.f32 %v594, 0.0
        %v639 = vmax.f32 %v596, 0.0
        %v640 = vmax.f32 %v487, 0.0
        %v641 = vmax.f32 %v489, 0.0
        %v642 = vmax.f32 %v600, 0.0
        %v643 = vmax.f32 %v602, 0.0
        %v644 = vmax.f32 %v493, 0.0
        %v645 = vmax.f32 %v495, 0.0
        %v646 = vmax.f32 %v606, 0.0
        %v647 = vmax.f32 %v608, 0.0
        %v648 = vmax.f32 %v499, 0.0
        %v649 = vmax.f32 %v501, 0.0
        %v650 = vmax.f32 %v612, 0.0
        %v651 = vmax.f32 %v614, 0.0
        %v652 = vmax.f32 %v505, 0.0
        %v653 = vmax.f32 %v507, 0.0
        %v654 = vmax.f32 %v618, 0.0
        %v655 = vmax.f32 %v620, 0.0
        %v656 = vmax.f32 %v511, 0.0
        %v657 = vmax.f32 %v513, 0.0
        %v658 = vmax.f32 %v624, 0.0
        %v659 = vmax.f32 %v626, 0.0
        %v662 = vcombine.high %v295, %v295
        %v663 = vcombine.high %v296, %v296
        %vm664 = vcmask 23552
        %v665 = vsel %vm664, %v321, 0
        %v667 = vsel %vm664, %v322, 0
        %v669 = vsel %vm664, %v323, 0
        %v671 = vsel %vm664, %v324, 0
        %v673 = vsel %vm664, %v325, 0
        %v675 = vsel %vm664, %v326, 0
        %v677 = vsel %vm664, %v327, 0
        %v679 = vsel %vm664, %v328, 0
        %v682 = vsel %vm664, %v329, 0
        %v685 = vsel %vm664, %v330, 0
        %v688 = vsel %vm664, %v331, 0
        %v691 = vsel %vm664, %v332, 0
        %v694 = vsel %vm664, %v333, 0
        %v697 = vsel %vm664, %v334, 0
        %v700 = vsel %vm664, %v335, 0
        %v703 = vsel %vm664, %v336, 0
        %vm705 = vcmask 1042432
        %v706 = vsel %vm705, %v295, 0
        %v708 = vsel %vm705, %v662, 0
        %v710 = vsel %vm705, %v296, 0
        %v712 = vsel %vm705, %v663, 0
        %714 = vmatprep.subr.mxu0 0.0
        %715 = vmatpush1.msra.mxu0 0.0
        %716 = vmatprep.subr.mxu0 0.0
        %717 = vmatpush1.msra.mxu0 0.0
        %718 = vmatprep.subr.mxu0 0.0
        %719 = vmatpush1.msra.mxu0 0.0
        %720 = vmatprep.subr.mxu0 0.0
        %721 = vmatpush1.msra.mxu0 0.0
        %722 = vmatprep.subr.mxu0 0.0
        %723 = vmatpush1.msra.mxu0 0.0
        %724 = vmatprep.subr.mxu0 0.0
        %725 = vmatpush1.msra.mxu0 0.0
        %726 = vmatprep.subr.mxu0 0.0
        %727 = vmatpush1.msra.mxu0 0.0
        %728 = vmatprep.subr.mxu0 0.0
        %729 = vmatpush1.msra.mxu0 0.0
        %730 = vmatprep.subr.mxu0 0.0
        %731 = vmatpush1.msra.mxu0 0.0
        %732 = vmatprep.subr.mxu0 0.0
        %733 = vmatpush1.msra.mxu0 0.0
        %734 = vmatprep.subr.mxu0 0.0
        %735 = vmatpush1.msra.mxu0 0.0
        %736 = vmatprep.subr.mxu0 0.0
        %737 = vmatpush1.msra.mxu0 0.0
        %738 = vmatprep.subr.mxu0 0.0
        %739 = vmatpush1.msra.mxu0 0.0
        %740 = vmatprep.subr.mxu0 0.0
        %741 = vmatpush1.msra.mxu0 0.0
        %742 = vmatprep.subr.mxu0 0.0
        %743 = vmatpush1.msra.mxu0 0.0
        %744 = vmatprep.subr.mxu0 %v708
        %745 = vmatpush1.msra.mxu0 %v706
        %746 = vmatprep.subr.mxu0 0.0
        %747 = vmatpush2.msra.mxu0 0.0
        %748 = vmatprep.subr.mxu0 0.0
        %749 = vmatpush2.msra.mxu0 0.0
        %750 = vmatprep.subr.mxu0 0.0
        %751 = vmatpush2.msra.mxu0 0.0
        %752 = vmatprep.subr.mxu0 0.0
        %753 = vmatpush2.msra.mxu0 0.0
        %754 = vmatprep.subr.mxu0 0.0
        %755 = vmatpush2.msra.mxu0 0.0
        %756 = vmatprep.subr.mxu0 0.0
        %757 = vmatpush2.msra.mxu0 0.0
        %758 = vmatprep.subr.mxu0 0.0
        %759 = vmatpush2.msra.mxu0 0.0
        %760 = vmatprep.subr.mxu0 0.0
        %761 = vmatpush2.msra.mxu0 0.0
        %762 = vmatprep.subr.mxu0 0.0
        %763 = vmatpush2.msra.mxu0 0.0
        %764 = vmatprep.subr.mxu0 0.0
        %765 = vmatpush2.msra.mxu0 0.0
        %766 = vmatprep.subr.mxu0 0.0
        %767 = vmatpush2.msra.mxu0 0.0
        %768 = vmatprep.subr.mxu0 0.0
        %769 = vmatpush2.msra.mxu0 0.0
        %770 = vmatprep.subr.mxu0 0.0
        %771 = vmatpush2.msra.mxu0 0.0
        %772 = vmatprep.subr.mxu0 0.0
        %773 = vmatpush2.msra.mxu0 0.0
        %774 = vmatprep.subr.mxu0 0.0
        %775 = vmatpush2.msra.mxu0 0.0
        %776 = vmatprep.subr.mxu0 0.0
        %777 = vmatpush2.msra.mxu0 0.0
        %778 = vmatprep.mubr.f32.mxu0 0.0
        %779 = vmatmul.mubr.f32.gmra.mxu0 %v665
        %v780 = vpop.f32.mrf.mxu0
        %v781 = vadd.f32 0.0, %v780
        %v782 = vpop.f32.mrf.mxu0
        %v783 = vadd.f32 0.0, %v782
        %784 = vmatprep.mubr.f32.mxu0 0.0
        %785 = vmatmul.mubr.f32.gmra.mxu0 %v667
        %v786 = vpop.f32.mrf.mxu0
        %v787 = vadd.f32 0.0, %v786
        %v788 = vpop.f32.mrf.mxu0
        %v789 = vadd.f32 0.0, %v788
        %790 = vmatprep.mubr.f32.mxu0 0.0
        %791 = vmatmul.mubr.f32.gmra.mxu0 %v669
        %v792 = vpop.f32.mrf.mxu0
        %v793 = vadd.f32 0.0, %v792
        %v794 = vpop.f32.mrf.mxu0
        %v795 = vadd.f32 0.0, %v794
        %796 = vmatprep.mubr.f32.mxu0 0.0
        %797 = vmatmul.mubr.f32.gmra.mxu0 %v671
        %v798 = vpop.f32.mrf.mxu0
        %v799 = vadd.f32 0.0, %v798
        %v800 = vpop.f32.mrf.mxu0
        %v801 = vadd.f32 0.0, %v800
        %802 = vmatprep.mubr.f32.mxu0 0.0
        %803 = vmatmul.mubr.f32.gmra.mxu0 %v673
        %v804 = vpop.f32.mrf.mxu0
        %v805 = vadd.f32 0.0, %v804
        %v806 = vpop.f32.mrf.mxu0
        %v807 = vadd.f32 0.0, %v806
        %808 = vmatprep.mubr.f32.mxu0 0.0
        %809 = vmatmul.mubr.f32.gmra.mxu0 %v675
        %v810 = vpop.f32.mrf.mxu0
        %v811 = vadd.f32 0.0, %v810
        %v812 = vpop.f32.mrf.mxu0
        %v813 = vadd.f32 0.0, %v812
        %814 = vmatprep.mubr.f32.mxu0 0.0
        %815 = vmatmul.mubr.f32.gmra.mxu0 %v677
        %v816 = vpop.f32.mrf.mxu0
        %v817 = vadd.f32 0.0, %v816
        %v818 = vpop.f32.mrf.mxu0
        %v819 = vadd.f32 0.0, %v818
        %820 = vmatprep.mubr.f32.mxu0 0.0
        %821 = vmatmul.mubr.f32.gmra.mxu0 %v679
        %v822 = vpop.f32.mrf.mxu0
        %v823 = vadd.f32 0.0, %v822
        %v824 = vpop.f32.mrf.mxu0
        %v825 = vadd.f32 0.0, %v824
        %826 = vmatprep.mubr.f32.mxu0 0.0
        %827 = vmatmul.mubr.f32.gmra.mxu0 %v682
        %v828 = vpop.f32.mrf.mxu0
        %v829 = vadd.f32 0.0, %v828
        %v830 = vpop.f32.mrf.mxu0
        %v831 = vadd.f32 0.0, %v830
        %832 = vmatprep.mubr.f32.mxu0 0.0
        %833 = vmatmul.mubr.f32.gmra.mxu0 %v685
        %v834 = vpop.f32.mrf.mxu0
        %v835 = vadd.f32 0.0, %v834
        %v836 = vpop.f32.mrf.mxu0
        %v837 = vadd.f32 0.0, %v836
        %838 = vmatprep.mubr.f32.mxu0 0.0
        %839 = vmatmul.mubr.f32.gmra.mxu0 %v688
        %v840 = vpop.f32.mrf.mxu0
        %v841 = vadd.f32 0.0, %v840
        %v842 = vpop.f32.mrf.mxu0
        %v843 = vadd.f32 0.0, %v842
        %844 = vmatprep.mubr.f32.mxu0 0.0
        %845 = vmatmul.mubr.f32.gmra.mxu0 %v691
        %v846 = vpop.f32.mrf.mxu0
        %v847 = vadd.f32 0.0, %v846
        %v848 = vpop.f32.mrf.mxu0
        %v849 = vadd.f32 0.0, %v848
        %850 = vmatprep.mubr.f32.mxu0 0.0
        %851 = vmatmul.mubr.f32.gmra.mxu0 %v694
        %v852 = vpop.f32.mrf.mxu0
        %v853 = vadd.f32 0.0, %v852
        %v854 = vpop.f32.mrf.mxu0
        %v855 = vadd.f32 0.0, %v854
        %856 = vmatprep.mubr.f32.mxu0 0.0
        %857 = vmatmul.mubr.f32.gmra.mxu0 %v697
        %v858 = vpop.f32.mrf.mxu0
        %v859 = vadd.f32 0.0, %v858
        %v860 = vpop.f32.mrf.mxu0
        %v861 = vadd.f32 0.0, %v860
        %862 = vmatprep.mubr.f32.mxu0 0.0
        %863 = vmatmul.mubr.f32.gmra.mxu0 %v700
        %v864 = vpop.f32.mrf.mxu0
        %v865 = vadd.f32 0.0, %v864
        %v866 = vpop.f32.mrf.mxu0
        %v867 = vadd.f32 0.0, %v866
        %868 = vmatprep.mubr.f32.mxu0 0.0
        %869 = vmatmul.mubr.f32.gmra.mxu0 %v703
        %v870 = vpop.f32.mrf.mxu0
        %v871 = vadd.f32 0.0, %v870
        %v872 = vpop.f32.mrf.mxu0
        %v873 = vadd.f32 0.0, %v872
        %874 = vdwg.mxu0
        %875 = vmatprep.subr.mxu0 0.0
        %876 = vmatpush1.msra.mxu0 0.0
        %877 = vmatprep.subr.mxu0 0.0
        %878 = vmatpush1.msra.mxu0 0.0
        %879 = vmatprep.subr.mxu0 0.0
        %880 = vmatpush1.msra.mxu0 0.0
        %881 = vmatprep.subr.mxu0 0.0
        %882 = vmatpush1.msra.mxu0 0.0
        %883 = vmatprep.subr.mxu0 0.0
        %884 = vmatpush1.msra.mxu0 0.0
        %885 = vmatprep.subr.mxu0 0.0
        %886 = vmatpush1.msra.mxu0 0.0
        %887 = vmatprep.subr.mxu0 0.0
        %888 = vmatpush1.msra.mxu0 0.0
        %889 = vmatprep.subr.mxu0 0.0
        %890 = vmatpush1.msra.mxu0 0.0
        %891 = vmatprep.subr.mxu0 0.0
        %892 = vmatpush1.msra.mxu0 0.0
        %893 = vmatprep.subr.mxu0 0.0
        %894 = vmatpush1.msra.mxu0 0.0
        %895 = vmatprep.subr.mxu0 0.0
        %896 = vmatpush1.msra.mxu0 0.0
        %897 = vmatprep.subr.mxu0 0.0
        %898 = vmatpush1.msra.mxu0 0.0
        %899 = vmatprep.subr.mxu0 0.0
        %900 = vmatpush1.msra.mxu0 0.0
        %901 = vmatprep.subr.mxu0 0.0
        %902 = vmatpush1.msra.mxu0 0.0
        %903 = vmatprep.subr.mxu0 0.0
        %904 = vmatpush1.msra.mxu0 0.0
        %905 = vmatprep.subr.mxu0 %v712
        %906 = vmatpush1.msra.mxu0 %v710
        %907 = vmatprep.subr.mxu0 0.0
        %908 = vmatpush2.msra.mxu0 0.0
        %909 = vmatprep.subr.mxu0 0.0
        %910 = vmatpush2.msra.mxu0 0.0
        %911 = vmatprep.subr.mxu0 0.0
        %912 = vmatpush2.msra.mxu0 0.0
        %913 = vmatprep.subr.mxu0 0.0
        %914 = vmatpush2.msra.mxu0 0.0
        %915 = vmatprep.subr.mxu0 0.0
        %916 = vmatpush2.msra.mxu0 0.0
        %917 = vmatprep.subr.mxu0 0.0
        %918 = vmatpush2.msra.mxu0 0.0
        %919 = vmatprep.subr.mxu0 0.0
        %920 = vmatpush2.msra.mxu0 0.0
        %921 = vmatprep.subr.mxu0 0.0
        %922 = vmatpush2.msra.mxu0 0.0
        %923 = vmatprep.subr.mxu0 0.0
        %924 = vmatpush2.msra.mxu0 0.0
        %925 = vmatprep.subr.mxu0 0.0
        %926 = vmatpush2.msra.mxu0 0.0
        %927 = vmatprep.subr.mxu0 0.0
        %928 = vmatpush2.msra.mxu0 0.0
        %929 = vmatprep.subr.mxu0 0.0
        %930 = vmatpush2.msra.mxu0 0.0
        %931 = vmatprep.subr.mxu0 0.0
        %932 = vmatpush2.msra.mxu0 0.0
        %933 = vmatprep.subr.mxu0 0.0
        %934 = vmatpush2.msra.mxu0 0.0
        %935 = vmatprep.subr.mxu0 0.0
        %936 = vmatpush2.msra.mxu0 0.0
        %937 = vmatprep.subr.mxu0 0.0
        %938 = vmatpush2.msra.mxu0 0.0
        %939 = vmatprep.mubr.f32.mxu0 0.0
        %940 = vmatmul.mubr.f32.gmra.mxu0 %v665
        %v941 = vpop.f32.mrf.mxu0
        %v942 = vadd.f32 0.0, %v941
        %v943 = vpop.f32.mrf.mxu0
        %v944 = vadd.f32 0.0, %v943
        %945 = vmatprep.mubr.f32.mxu0 0.0
        %946 = vmatmul.mubr.f32.gmra.mxu0 %v667
        %v947 = vpop.f32.mrf.mxu0
        %v948 = vadd.f32 0.0, %v947
        %v949 = vpop.f32.mrf.mxu0
        %v950 = vadd.f32 0.0, %v949
        %951 = vmatprep.mubr.f32.mxu0 0.0
        %952 = vmatmul.mubr.f32.gmra.mxu0 %v669
        %v953 = vpop.f32.mrf.mxu0
        %v954 = vadd.f32 0.0, %v953
        %v955 = vpop.f32.mrf.mxu0
        %v956 = vadd.f32 0.0, %v955
        %957 = vmatprep.mubr.f32.mxu0 0.0
        %958 = vmatmul.mubr.f32.gmra.mxu0 %v671
        %v959 = vpop.f32.mrf.mxu0
        %v960 = vadd.f32 0.0, %v959
        %v961 = vpop.f32.mrf.mxu0
        %v962 = vadd.f32 0.0, %v961
        %963 = vmatprep.mubr.f32.mxu0 0.0
        %964 = vmatmul.mubr.f32.gmra.mxu0 %v673
        %v965 = vpop.f32.mrf.mxu0
        %v966 = vadd.f32 0.0, %v965
        %v967 = vpop.f32.mrf.mxu0
        %v968 = vadd.f32 0.0, %v967
        %969 = vmatprep.mubr.f32.mxu0 0.0
        %970 = vmatmul.mubr.f32.gmra.mxu0 %v675
        %v971 = vpop.f32.mrf.mxu0
        %v972 = vadd.f32 0.0, %v971
        %v973 = vpop.f32.mrf.mxu0
        %v974 = vadd.f32 0.0, %v973
        %975 = vmatprep.mubr.f32.mxu0 0.0
        %976 = vmatmul.mubr.f32.gmra.mxu0 %v677
        %v977 = vpop.f32.mrf.mxu0
        %v978 = vadd.f32 0.0, %v977
        %v979 = vpop.f32.mrf.mxu0
        %v980 = vadd.f32 0.0, %v979
        %981 = vmatprep.mubr.f32.mxu0 0.0
        %982 = vmatmul.mubr.f32.gmra.mxu0 %v679
        %v983 = vpop.f32.mrf.mxu0
        %v984 = vadd.f32 0.0, %v983
        %v985 = vpop.f32.mrf.mxu0
        %v986 = vadd.f32 0.0, %v985
        %987 = vmatprep.mubr.f32.mxu0 0.0
        %988 = vmatmul.mubr.f32.gmra.mxu0 %v682
        %v989 = vpop.f32.mrf.mxu0
        %v990 = vadd.f32 0.0, %v989
        %v991 = vpop.f32.mrf.mxu0
        %v992 = vadd.f32 0.0, %v991
        %993 = vmatprep.mubr.f32.mxu0 0.0
        %994 = vmatmul.mubr.f32.gmra.mxu0 %v685
        %v995 = vpop.f32.mrf.mxu0
        %v996 = vadd.f32 0.0, %v995
        %v997 = vpop.f32.mrf.mxu0
        %v998 = vadd.f32 0.0, %v997
        %999 = vmatprep.mubr.f32.mxu0 0.0
        %1000 = vmatmul.mubr.f32.gmra.mxu0 %v688
        %v1001 = vpop.f32.mrf.mxu0
        %v1002 = vadd.f32 0.0, %v1001
        %v1003 = vpop.f32.mrf.mxu0
        %v1004 = vadd.f32 0.0, %v1003
        %1005 = vmatprep.mubr.f32.mxu0 0.0
        %1006 = vmatmul.mubr.f32.gmra.mxu0 %v691
        %v1007 = vpop.f32.mrf.mxu0
        %v1008 = vadd.f32 0.0, %v1007
        %v1009 = vpop.f32.mrf.mxu0
        %v1010 = vadd.f32 0.0, %v1009
        %1011 = vmatprep.mubr.f32.mxu0 0.0
        %1012 = vmatmul.mubr.f32.gmra.mxu0 %v694
        %v1013 = vpop.f32.mrf.mxu0
        %v1014 = vadd.f32 0.0, %v1013
        %v1015 = vpop.f32.mrf.mxu0
        %v1016 = vadd.f32 0.0, %v1015
        %1017 = vmatprep.mubr.f32.mxu0 0.0
        %1018 = vmatmul.mubr.f32.gmra.mxu0 %v697
        %v1019 = vpop.f32.mrf.mxu0
        %v1020 = vadd.f32 0.0, %v1019
        %v1021 = vpop.f32.mrf.mxu0
        %v1022 = vadd.f32 0.0, %v1021
        %1023 = vmatprep.mubr.f32.mxu0 0.0
        %1024 = vmatmul.mubr.f32.gmra.mxu0 %v700
        %v1025 = vpop.f32.mrf.mxu0
        %v1026 = vadd.f32 0.0, %v1025
        %v1027 = vpop.f32.mrf.mxu0
        %v1028 = vadd.f32 0.0, %v1027
        %1029 = vmatprep.mubr.f32.mxu0 0.0
        %1030 = vmatmul.mubr.f32.gmra.mxu0 %v703
        %v1031 = vpop.f32.mrf.mxu0
        %v1032 = vadd.f32 0.0, %v1031
        %v1033 = vpop.f32.mrf.mxu0
        %v1034 = vadd.f32 0.0, %v1033
        %1035 = vdwg.mxu0
        %1036 = vset.pattern.permute.xlu0 4
        %1037 = vperm.xlu0 %1036, %v321
        %v1038 = vpop.permute.xlu0 %1037
        %1040 = vset.pattern.permute.xlu0 4
        %1041 = vperm.xlu0 %1040, %v322
        %v1042 = vpop.permute.xlu0 %1041
        %1044 = vset.pattern.permute.xlu0 4
        %1045 = vperm.xlu0 %1044, %v323
        %v1046 = vpop.permute.xlu0 %1045
        %1048 = vset.pattern.permute.xlu0 4
        %1049 = vperm.xlu0 %1048, %v324
        %v1050 = vpop.permute.xlu0 %1049
        %1052 = vset.pattern.permute.xlu0 4
        %1053 = vperm.xlu0 %1052, %v325
        %v1054 = vpop.permute.xlu0 %1053
        %1056 = vset.pattern.permute.xlu0 4
        %1057 = vperm.xlu0 %1056, %v326
        %v1058 = vpop.permute.xlu0 %1057
        %1060 = vset.pattern.permute.xlu0 4
        %1061 = vperm.xlu0 %1060, %v327
        %v1062 = vpop.permute.xlu0 %1061
        %1064 = vset.pattern.permute.xlu0 4
        %1065 = vperm.xlu0 %1064, %v328
        %v1066 = vpop.permute.xlu0 %1065
        %v1068 = vadd.f32 %v781, %v1038
        %v1069 = vadd.f32 %v783, %v1038
        %v1070 = vadd.f32 %v942, %v1038
        %v1071 = vadd.f32 %v944, %v1038
        %v1072 = vadd.f32 %v787, %v1042
        %v1073 = vadd.f32 %v789, %v1042
        %v1074 = vadd.f32 %v948, %v1042
        %v1075 = vadd.f32 %v950, %v1042
        %v1076 = vadd.f32 %v793, %v1046
        %v1077 = vadd.f32 %v795, %v1046
        %v1078 = vadd.f32 %v954, %v1046
        %v1079 = vadd.f32 %v956, %v1046
        %v1080 = vadd.f32 %v799, %v1050
        %v1081 = vadd.f32 %v801, %v1050
        %v1082 = vadd.f32 %v960, %v1050
        %v1083 = vadd.f32 %v962, %v1050
        %v1084 = vadd.f32 %v805, %v1054
        %v1085 = vadd.f32 %v807, %v1054
        %v1086 = vadd.f32 %v966, %v1054
        %v1087 = vadd.f32 %v968, %v1054
        %v1088 = vadd.f32 %v811, %v1058
        %v1089 = vadd.f32 %v813, %v1058
        %v1090 = vadd.f32 %v972, %v1058
        %v1091 = vadd.f32 %v974, %v1058
        %v1092 = vadd.f32 %v817, %v1062
        %v1093 = vadd.f32 %v819, %v1062
        %v1094 = vadd.f32 %v978, %v1062
        %v1095 = vadd.f32 %v980, %v1062
        %v1096 = vadd.f32 %v823, %v1066
        %v1097 = vadd.f32 %v825, %v1066
        %v1098 = vadd.f32 %v984, %v1066
        %v1099 = vadd.f32 %v986, %v1066
        %v1100 = vmax.f32 %v1068, 0.0
        %v1101 = vmax.f32 %v1069, 0.0
        %v1102 = vmax.f32 %v1070, 0.0
        %v1103 = vmax.f32 %v1071, 0.0
        %v1104 = vmax.f32 %v1072, 0.0
        %v1105 = vmax.f32 %v1073, 0.0
        %v1106 = vmax.f32 %v1074, 0.0
        %v1107 = vmax.f32 %v1075, 0.0
        %v1108 = vmax.f32 %v1076, 0.0
        %v1109 = vmax.f32 %v1077, 0.0
        %v1110 = vmax.f32 %v1078, 0.0
        %v1111 = vmax.f32 %v1079, 0.0
        %v1112 = vmax.f32 %v1080, 0.0
        %v1113 = vmax.f32 %v1081, 0.0
        %v1114 = vmax.f32 %v1082, 0.0
        %v1115 = vmax.f32 %v1083, 0.0
        %v1116 = vmax.f32 %v1084, 0.0
        %v1117 = vmax.f32 %v1085, 0.0
        %v1118 = vmax.f32 %v1086, 0.0
        %v1119 = vmax.f32 %v1087, 0.0
        %v1120 = vmax.f32 %v1088, 0.0
        %v1121 = vmax.f32 %v1089, 0.0
        %v1122 = vmax.f32 %v1090, 0.0
        %v1123 = vmax.f32 %v1091, 0.0
        %v1124 = vmax.f32 %v1092, 0.0
        %v1125 = vmax.f32 %v1093, 0.0
        %v1126 = vmax.f32 %v1094, 0.0
        %v1127 = vmax.f32 %v1095, 0.0
        %v1128 = vmax.f32 %v1096, 0.0
        %v1129 = vmax.f32 %v1097, 0.0
        %v1130 = vmax.f32 %v1098, 0.0
        %v1131 = vmax.f32 %v1099, 0.0
        %v1133 = vsel %vm377, %v313, 0
        %v1136 = vsel %vm377, %v314, 0
        %v1139 = vsel %vm377, %v315, 0
        %v1142 = vsel %vm377, %v316, 0
        %v1145 = vsel %vm377, %v317, 0
        %v1148 = vsel %vm377, %v318, 0
        %v1151 = vsel %vm377, %v319, 0
        %v1154 = vsel %vm377, %v320, 0
        %1156 = vmatprep.subr.mxu0 0.0
        %1157 = vmatpush1.msra.mxu0 0.0
        %1158 = vmatprep.subr.mxu0 0.0
        %1159 = vmatpush1.msra.mxu0 0.0
        %1160 = vmatprep.subr.mxu0 0.0
        %1161 = vmatpush1.msra.mxu0 0.0
        %1162 = vmatprep.subr.mxu0 0.0
        %1163 = vmatpush1.msra.mxu0 0.0
        %1164 = vmatprep.subr.mxu0 0.0
        %1165 = vmatpush1.msra.mxu0 0.0
        %1166 = vmatprep.subr.mxu0 0.0
        %1167 = vmatpush1.msra.mxu0 0.0
        %1168 = vmatprep.subr.mxu0 0.0
        %1169 = vmatpush1.msra.mxu0 0.0
        %1170 = vmatprep.subr.mxu0 0.0
        %1171 = vmatpush1.msra.mxu0 0.0
        %1172 = vmatprep.subr.mxu0 %v1129
        %1173 = vmatpush1.msra.mxu0 %v1128
        %1174 = vmatprep.subr.mxu0 %v1125
        %1175 = vmatpush1.msra.mxu0 %v1124
        %1176 = vmatprep.subr.mxu0 %v1121
        %1177 = vmatpush1.msra.mxu0 %v1120
        %1178 = vmatprep.subr.mxu0 %v1117
        %1179 = vmatpush1.msra.mxu0 %v1116
        %1180 = vmatprep.subr.mxu0 %v1113
        %1181 = vmatpush1.msra.mxu0 %v1112
        %1182 = vmatprep.subr.mxu0 %v1109
        %1183 = vmatpush1.msra.mxu0 %v1108
        %1184 = vmatprep.subr.mxu0 %v1105
        %1185 = vmatpush1.msra.mxu0 %v1104
        %1186 = vmatprep.subr.mxu0 %v1101
        %1187 = vmatpush1.msra.mxu0 %v1100
        %1188 = vmatprep.subr.mxu0 0.0
        %1189 = vmatpush2.msra.mxu0 0.0
        %1190 = vmatprep.subr.mxu0 0.0
        %1191 = vmatpush2.msra.mxu0 0.0
        %1192 = vmatprep.subr.mxu0 0.0
        %1193 = vmatpush2.msra.mxu0 0.0
        %1194 = vmatprep.subr.mxu0 0.0
        %1195 = vmatpush2.msra.mxu0 0.0
        %1196 = vmatprep.subr.mxu0 0.0
        %1197 = vmatpush2.msra.mxu0 0.0
        %1198 = vmatprep.subr.mxu0 0.0
        %1199 = vmatpush2.msra.mxu0 0.0
        %1200 = vmatprep.subr.mxu0 0.0
        %1201 = vmatpush2.msra.mxu0 0.0
        %1202 = vmatprep.subr.mxu0 0.0
        %1203 = vmatpush2.msra.mxu0 0.0
        %1204 = vmatprep.subr.mxu0 0.0
        %1205 = vmatpush2.msra.mxu0 0.0
        %1206 = vmatprep.subr.mxu0 0.0
        %1207 = vmatpush2.msra.mxu0 0.0
        %1208 = vmatprep.subr.mxu0 0.0
        %1209 = vmatpush2.msra.mxu0 0.0
        %1210 = vmatprep.subr.mxu0 0.0
        %1211 = vmatpush2.msra.mxu0 0.0
        %1212 = vmatprep.subr.mxu0 0.0
        %1213 = vmatpush2.msra.mxu0 0.0
        %1214 = vmatprep.subr.mxu0 0.0
        %1215 = vmatpush2.msra.mxu0 0.0
        %1216 = vmatprep.subr.mxu0 0.0
        %1217 = vmatpush2.msra.mxu0 0.0
        %1218 = vmatprep.subr.mxu0 0.0
        %1219 = vmatpush2.msra.mxu0 0.0
        %1220 = vmatprep.mubr.f32.mxu0 0.0
        %1221 = vmatmul.mubr.f32.gmra.mxu0 %v1133
        %v1222 = vpop.f32.mrf.mxu0
        %v1223 = vadd.f32 0.0, %v1222
        %v1224 = vpop.f32.mrf.mxu0
        %v1225 = vadd.f32 0.0, %v1224
        %1226 = vmatprep.mubr.f32.mxu0 0.0
        %1227 = vmatmul.mubr.f32.gmra.mxu0 %v1136
        %v1228 = vpop.f32.mrf.mxu0
        %v1229 = vadd.f32 0.0, %v1228
        %v1230 = vpop.f32.mrf.mxu0
        %v1231 = vadd.f32 0.0, %v1230
        %1232 = vmatprep.mubr.f32.mxu0 0.0
        %1233 = vmatmul.mubr.f32.gmra.mxu0 %v1139
        %v1234 = vpop.f32.mrf.mxu0
        %v1235 = vadd.f32 0.0, %v1234
        %v1236 = vpop.f32.mrf.mxu0
        %v1237 = vadd.f32 0.0, %v1236
        %1238 = vmatprep.mubr.f32.mxu0 0.0
        %1239 = vmatmul.mubr.f32.gmra.mxu0 %v1142
        %v1240 = vpop.f32.mrf.mxu0
        %v1241 = vadd.f32 0.0, %v1240
        %v1242 = vpop.f32.mrf.mxu0
        %v1243 = vadd.f32 0.0, %v1242
        %1244 = vmatprep.mubr.f32.mxu0 0.0
        %1245 = vmatmul.mubr.f32.gmra.mxu0 %v1145
        %v1246 = vpop.f32.mrf.mxu0
        %v1247 = vadd.f32 0.0, %v1246
        %v1248 = vpop.f32.mrf.mxu0
        %v1249 = vadd.f32 0.0, %v1248
        %1250 = vmatprep.mubr.f32.mxu0 0.0
        %1251 = vmatmul.mubr.f32.gmra.mxu0 %v1148
        %v1252 = vpop.f32.mrf.mxu0
        %v1253 = vadd.f32 0.0, %v1252
        %v1254 = vpop.f32.mrf.mxu0
        %v1255 = vadd.f32 0.0, %v1254
        %1256 = vmatprep.mubr.f32.mxu0 0.0
        %1257 = vmatmul.mubr.f32.gmra.mxu0 %v1151
        %v1258 = vpop.f32.mrf.mxu0
        %v1259 = vadd.f32 0.0, %v1258
        %v1260 = vpop.f32.mrf.mxu0
        %v1261 = vadd.f32 0.0, %v1260
        %1262 = vmatprep.mubr.f32.mxu0 0.0
        %1263 = vmatmul.mubr.f32.gmra.mxu0 %v1154
        %v1264 = vpop.f32.mrf.mxu0
        %v1265 = vadd.f32 0.0, %v1264
        %v1266 = vpop.f32.mrf.mxu0
        %v1267 = vadd.f32 0.0, %v1266
        %1268 = vdwg.mxu0
        %1269 = vmatprep.subr.mxu0 0.0
        %1270 = vmatpush1.msra.mxu0 0.0
        %1271 = vmatprep.subr.mxu0 0.0
        %1272 = vmatpush1.msra.mxu0 0.0
        %1273 = vmatprep.subr.mxu0 0.0
        %1274 = vmatpush1.msra.mxu0 0.0
        %1275 = vmatprep.subr.mxu0 0.0
        %1276 = vmatpush1.msra.mxu0 0.0
        %1277 = vmatprep.subr.mxu0 0.0
        %1278 = vmatpush1.msra.mxu0 0.0
        %1279 = vmatprep.subr.mxu0 0.0
        %1280 = vmatpush1.msra.mxu0 0.0
        %1281 = vmatprep.subr.mxu0 0.0
        %1282 = vmatpush1.msra.mxu0 0.0
        %1283 = vmatprep.subr.mxu0 0.0
        %1284 = vmatpush1.msra.mxu0 0.0
        %1285 = vmatprep.subr.mxu0 %v1131
        %1286 = vmatpush1.msra.mxu0 %v1130
        %1287 = vmatprep.subr.mxu0 %v1127
        %1288 = vmatpush1.msra.mxu0 %v1126
        %1289 = vmatprep.subr.mxu0 %v1123
        %1290 = vmatpush1.msra.mxu0 %v1122
        %1291 = vmatprep.subr.mxu0 %v1119
        %1292 = vmatpush1.msra.mxu0 %v1118
        %1293 = vmatprep.subr.mxu0 %v1115
        %1294 = vmatpush1.msra.mxu0 %v1114
        %1295 = vmatprep.subr.mxu0 %v1111
        %1296 = vmatpush1.msra.mxu0 %v1110
        %1297 = vmatprep.subr.mxu0 %v1107
        %1298 = vmatpush1.msra.mxu0 %v1106
        %1299 = vmatprep.subr.mxu0 %v1103
        %1300 = vmatpush1.msra.mxu0 %v1102
        %1301 = vmatprep.subr.mxu0 0.0
        %1302 = vmatpush2.msra.mxu0 0.0
        %1303 = vmatprep.subr.mxu0 0.0
        %1304 = vmatpush2.msra.mxu0 0.0
        %1305 = vmatprep.subr.mxu0 0.0
        %1306 = vmatpush2.msra.mxu0 0.0
        %1307 = vmatprep.subr.mxu0 0.0
        %1308 = vmatpush2.msra.mxu0 0.0
        %1309 = vmatprep.subr.mxu0 0.0
        %1310 = vmatpush2.msra.mxu0 0.0
        %1311 = vmatprep.subr.mxu0 0.0
        %1312 = vmatpush2.msra.mxu0 0.0
        %1313 = vmatprep.subr.mxu0 0.0
        %1314 = vmatpush2.msra.mxu0 0.0
        %1315 = vmatprep.subr.mxu0 0.0
        %1316 = vmatpush2.msra.mxu0 0.0
        %1317 = vmatprep.subr.mxu0 0.0
        %1318 = vmatpush2.msra.mxu0 0.0
        %1319 = vmatprep.subr.mxu0 0.0
        %1320 = vmatpush2.msra.mxu0 0.0
        %1321 = vmatprep.subr.mxu0 0.0
        %1322 = vmatpush2.msra.mxu0 0.0
        %1323 = vmatprep.subr.mxu0 0.0
        %1324 = vmatpush2.msra.mxu0 0.0
        %1325 = vmatprep.subr.mxu0 0.0
        %1326 = vmatpush2.msra.mxu0 0.0
        %1327 = vmatprep.subr.mxu0 0.0
        %1328 = vmatpush2.msra.mxu0 0.0
        %1329 = vmatprep.subr.mxu0 0.0
        %1330 = vmatpush2.msra.mxu0 0.0
        %1331 = vmatprep.subr.mxu0 0.0
        %1332 = vmatpush2.msra.mxu0 0.0
        %1333 = vmatprep.mubr.f32.mxu0 0.0
        %1334 = vmatmul.mubr.f32.gmra.mxu0 %v1133
        %v1335 = vpop.f32.mrf.mxu0
        %v1336 = vadd.f32 0.0, %v1335
        %v1337 = vpop.f32.mrf.mxu0
        %v1338 = vadd.f32 0.0, %v1337
        %1339 = vmatprep.mubr.f32.mxu0 0.0
        %1340 = vmatmul.mubr.f32.gmra.mxu0 %v1136
        %v1341 = vpop.f32.mrf.mxu0
        %v1342 = vadd.f32 0.0, %v1341
        %v1343 = vpop.f32.mrf.mxu0
        %v1344 = vadd.f32 0.0, %v1343
        %1345 = vmatprep.mubr.f32.mxu0 0.0
        %1346 = vmatmul.mubr.f32.gmra.mxu0 %v1139
        %v1347 = vpop.f32.mrf.mxu0
        %v1348 = vadd.f32 0.0, %v1347
        %v1349 = vpop.f32.mrf.mxu0
        %v1350 = vadd.f32 0.0, %v1349
        %1351 = vmatprep.mubr.f32.mxu0 0.0
        %1352 = vmatmul.mubr.f32.gmra.mxu0 %v1142
        %v1353 = vpop.f32.mrf.mxu0
        %v1354 = vadd.f32 0.0, %v1353
        %v1355 = vpop.f32.mrf.mxu0
        %v1356 = vadd.f32 0.0, %v1355
        %1357 = vmatprep.mubr.f32.mxu0 0.0
        %1358 = vmatmul.mubr.f32.gmra.mxu0 %v1145
        %v1359 = vpop.f32.mrf.mxu0
        %v1360 = vadd.f32 0.0, %v1359
        %v1361 = vpop.f32.mrf.mxu0
        %v1362 = vadd.f32 0.0, %v1361
        %1363 = vmatprep.mubr.f32.mxu0 0.0
        %1364 = vmatmul.mubr.f32.gmra.mxu0 %v1148
        %v1365 = vpop.f32.mrf.mxu0
        %v1366 = vadd.f32 0.0, %v1365
        %v1367 = vpop.f32.mrf.mxu0
        %v1368 = vadd.f32 0.0, %v1367
        %1369 = vmatprep.mubr.f32.mxu0 0.0
        %1370 = vmatmul.mubr.f32.gmra.mxu0 %v1151
        %v1371 = vpop.f32.mrf.mxu0
        %v1372 = vadd.f32 0.0, %v1371
        %v1373 = vpop.f32.mrf.mxu0
        %v1374 = vadd.f32 0.0, %v1373
        %1375 = vmatprep.mubr.f32.mxu0 0.0
        %1376 = vmatmul.mubr.f32.gmra.mxu0 %v1154
        %v1377 = vpop.f32.mrf.mxu0
        %v1378 = vadd.f32 0.0, %v1377
        %v1379 = vpop.f32.mrf.mxu0
        %v1380 = vadd.f32 0.0, %v1379
        %1381 = vdwg.mxu0
        %v1383 = vsel %vm377, %v305, 0
        %v1386 = vsel %vm377, %v306, 0
        %v1389 = vsel %vm377, %v307, 0
        %v1392 = vsel %vm377, %v308, 0
        %v1395 = vsel %vm377, %v309, 0
        %v1398 = vsel %vm377, %v310, 0
        %v1401 = vsel %vm377, %v311, 0
        %v1404 = vsel %vm377, %v312, 0
        %1406 = vmatprep.subr.mxu0 0.0
        %1407 = vmatpush1.msra.mxu0 0.0
        %1408 = vmatprep.subr.mxu0 0.0
        %1409 = vmatpush1.msra.mxu0 0.0
        %1410 = vmatprep.subr.mxu0 0.0
        %1411 = vmatpush1.msra.mxu0 0.0
        %1412 = vmatprep.subr.mxu0 0.0
        %1413 = vmatpush1.msra.mxu0 0.0
        %1414 = vmatprep.subr.mxu0 0.0
        %1415 = vmatpush1.msra.mxu0 0.0
        %1416 = vmatprep.subr.mxu0 0.0
        %1417 = vmatpush1.msra.mxu0 0.0
        %1418 = vmatprep.subr.mxu0 0.0
        %1419 = vmatpush1.msra.mxu0 0.0
        %1420 = vmatprep.subr.mxu0 0.0
        %1421 = vmatpush1.msra.mxu0 0.0
        %1422 = vmatprep.subr.mxu0 %v657
        %1423 = vmatpush1.msra.mxu0 %v656
        %1424 = vmatprep.subr.mxu0 %v653
        %1425 = vmatpush1.msra.mxu0 %v652
        %1426 = vmatprep.subr.mxu0 %v649
        %1427 = vmatpush1.msra.mxu0 %v648
        %1428 = vmatprep.subr.mxu0 %v645
        %1429 = vmatpush1.msra.mxu0 %v644
        %1430 = vmatprep.subr.mxu0 %v641
        %1431 = vmatpush1.msra.mxu0 %v640
        %1432 = vmatprep.subr.mxu0 %v637
        %1433 = vmatpush1.msra.mxu0 %v636
        %1434 = vmatprep.subr.mxu0 %v633
        %1435 = vmatpush1.msra.mxu0 %v632
        %1436 = vmatprep.subr.mxu0 %v629
        %1437 = vmatpush1.msra.mxu0 %v628
        %1438 = vmatprep.subr.mxu0 0.0
        %1439 = vmatpush2.msra.mxu0 0.0
        %1440 = vmatprep.subr.mxu0 0.0
        %1441 = vmatpush2.msra.mxu0 0.0
        %1442 = vmatprep.subr.mxu0 0.0
        %1443 = vmatpush2.msra.mxu0 0.0
        %1444 = vmatprep.subr.mxu0 0.0
        %1445 = vmatpush2.msra.mxu0 0.0
        %1446 = vmatprep.subr.mxu0 0.0
        %1447 = vmatpush2.msra.mxu0 0.0
        %1448 = vmatprep.subr.mxu0 0.0
        %1449 = vmatpush2.msra.mxu0 0.0
        %1450 = vmatprep.subr.mxu0 0.0
        %1451 = vmatpush2.msra.mxu0 0.0
        %1452 = vmatprep.subr.mxu0 0.0
        %1453 = vmatpush2.msra.mxu0 0.0
        %1454 = vmatprep.subr.mxu0 0.0
        %1455 = vmatpush2.msra.mxu0 0.0
        %1456 = vmatprep.subr.mxu0 0.0
        %1457 = vmatpush2.msra.mxu0 0.0
        %1458 = vmatprep.subr.mxu0 0.0
        %1459 = vmatpush2.msra.mxu0 0.0
        %1460 = vmatprep.subr.mxu0 0.0
        %1461 = vmatpush2.msra.mxu0 0.0
        %1462 = vmatprep.subr.mxu0 0.0
        %1463 = vmatpush2.msra.mxu0 0.0
        %1464 = vmatprep.subr.mxu0 0.0
        %1465 = vmatpush2.msra.mxu0 0.0
        %1466 = vmatprep.subr.mxu0 0.0
        %1467 = vmatpush2.msra.mxu0 0.0
        %1468 = vmatprep.subr.mxu0 0.0
        %1469 = vmatpush2.msra.mxu0 0.0
        %1470 = vmatprep.mubr.f32.mxu0 0.0
        %1471 = vmatmul.mubr.f32.gmra.mxu0 %v1383
        %v1472 = vpop.f32.mrf.mxu0
        %v1473 = vadd.f32 %v1223, %v1472
        %v1474 = vpop.f32.mrf.mxu0
        %v1475 = vadd.f32 %v1225, %v1474
        %1476 = vmatprep.mubr.f32.mxu0 0.0
        %1477 = vmatmul.mubr.f32.gmra.mxu0 %v1386
        %v1478 = vpop.f32.mrf.mxu0
        %v1479 = vadd.f32 %v1229, %v1478
        %v1480 = vpop.f32.mrf.mxu0
        %v1481 = vadd.f32 %v1231, %v1480
        %1482 = vmatprep.mubr.f32.mxu0 0.0
        %1483 = vmatmul.mubr.f32.gmra.mxu0 %v1389
        %v1484 = vpop.f32.mrf.mxu0
        %v1485 = vadd.f32 %v1235, %v1484
        %v1486 = vpop.f32.mrf.mxu0
        %v1487 = vadd.f32 %v1237, %v1486
        %1488 = vmatprep.mubr.f32.mxu0 0.0
        %1489 = vmatmul.mubr.f32.gmra.mxu0 %v1392
        %v1490 = vpop.f32.mrf.mxu0
        %v1491 = vadd.f32 %v1241, %v1490
        %v1492 = vpop.f32.mrf.mxu0
        %v1493 = vadd.f32 %v1243, %v1492
        %1494 = vmatprep.mubr.f32.mxu0 0.0
        %1495 = vmatmul.mubr.f32.gmra.mxu0 %v1395
        %v1496 = vpop.f32.mrf.mxu0
        %v1497 = vadd.f32 %v1247, %v1496
        %v1498 = vpop.f32.mrf.mxu0
        %v1499 = vadd.f32 %v1249, %v1498
        %1500 = vmatprep.mubr.f32.mxu0 0.0
        %1501 = vmatmul.mubr.f32.gmra.mxu0 %v1398
        %v1502 = vpop.f32.mrf.mxu0
        %v1503 = vadd.f32 %v1253, %v1502
        %v1504 = vpop.f32.mrf.mxu0
        %v1505 = vadd.f32 %v1255, %v1504
        %1506 = vmatprep.mubr.f32.mxu0 0.0
        %1507 = vmatmul.mubr.f32.gmra.mxu0 %v1401
        %v1508 = vpop.f32.mrf.mxu0
        %v1509 = vadd.f32 %v1259, %v1508
        %v1510 = vpop.f32.mrf.mxu0
        %v1511 = vadd.f32 %v1261, %v1510
        %1512 = vmatprep.mubr.f32.mxu0 0.0
        %1513 = vmatmul.mubr.f32.gmra.mxu0 %v1404
        %v1514 = vpop.f32.mrf.mxu0
        %v1515 = vadd.f32 %v1265, %v1514
        %v1516 = vpop.f32.mrf.mxu0
        %v1517 = vadd.f32 %v1267, %v1516
        %1518 = vdwg.mxu0
        %1519 = vmatprep.subr.mxu0 0.0
        %1520 = vmatpush1.msra.mxu0 0.0
        %1521 = vmatprep.subr.mxu0 0.0
        %1522 = vmatpush1.msra.mxu0 0.0
        %1523 = vmatprep.subr.mxu0 0.0
        %1524 = vmatpush1.msra.mxu0 0.0
        %1525 = vmatprep.subr.mxu0 0.0
        %1526 = vmatpush1.msra.mxu0 0.0
        %1527 = vmatprep.subr.mxu0 0.0
        %1528 = vmatpush1.msra.mxu0 0.0
        %1529 = vmatprep.subr.mxu0 0.0
        %1530 = vmatpush1.msra.mxu0 0.0
        %1531 = vmatprep.subr.mxu0 0.0
        %1532 = vmatpush1.msra.mxu0 0.0
        %1533 = vmatprep.subr.mxu0 0.0
        %1534 = vmatpush1.msra.mxu0 0.0
        %1535 = vmatprep.subr.mxu0 %v659
        %1536 = vmatpush1.msra.mxu0 %v658
        %1537 = vmatprep.subr.mxu0 %v655
        %1538 = vmatpush1.msra.mxu0 %v654
        %1539 = vmatprep.subr.mxu0 %v651
        %1540 = vmatpush1.msra.mxu0 %v650
        %1541 = vmatprep.subr.mxu0 %v647
        %1542 = vmatpush1.msra.mxu0 %v646
        %1543 = vmatprep.subr.mxu0 %v643
        %1544 = vmatpush1.msra.mxu0 %v642
        %1545 = vmatprep.subr.mxu0 %v639
        %1546 = vmatpush1.msra.mxu0 %v638
        %1547 = vmatprep.subr.mxu0 %v635
        %1548 = vmatpush1.msra.mxu0 %v634
        %1549 = vmatprep.subr.mxu0 %v631
        %1550 = vmatpush1.msra.mxu0 %v630
        %1551 = vmatprep.subr.mxu0 0.0
        %1552 = vmatpush2.msra.mxu0 0.0
        %1553 = vmatprep.subr.mxu0 0.0
        %1554 = vmatpush2.msra.mxu0 0.0
        %1555 = vmatprep.subr.mxu0 0.0
        %1556 = vmatpush2.msra.mxu0 0.0
        %1557 = vmatprep.subr.mxu0 0.0
        %1558 = vmatpush2.msra.mxu0 0.0
        %1559 = vmatprep.subr.mxu0 0.0
        %1560 = vmatpush2.msra.mxu0 0.0
        %1561 = vmatprep.subr.mxu0 0.0
        %1562 = vmatpush2.msra.mxu0 0.0
        %1563 = vmatprep.subr.mxu0 0.0
        %1564 = vmatpush2.msra.mxu0 0.0
        %1565 = vmatprep.subr.mxu0 0.0
        %1566 = vmatpush2.msra.mxu0 0.0
        %1567 = vmatprep.subr.mxu0 0.0
        %1568 = vmatpush2.msra.mxu0 0.0
        %1569 = vmatprep.subr.mxu0 0.0
        %1570 = vmatpush2.msra.mxu0 0.0
        %1571 = vmatprep.subr.mxu0 0.0
        %1572 = vmatpush2.msra.mxu0 0.0
        %1573 = vmatprep.subr.mxu0 0.0
        %1574 = vmatpush2.msra.mxu0 0.0
        %1575 = vmatprep.subr.mxu0 0.0
        %1576 = vmatpush2.msra.mxu0 0.0
        %1577 = vmatprep.subr.mxu0 0.0
        %1578 = vmatpush2.msra.mxu0 0.0
        %1579 = vmatprep.subr.mxu0 0.0
        %1580 = vmatpush2.msra.mxu0 0.0
        %1581 = vmatprep.subr.mxu0 0.0
        %1582 = vmatpush2.msra.mxu0 0.0
        %1583 = vmatprep.mubr.f32.mxu0 0.0
        %1584 = vmatmul.mubr.f32.gmra.mxu0 %v1383
        %v1585 = vpop.f32.mrf.mxu0
        %v1586 = vadd.f32 %v1336, %v1585
        %v1587 = vpop.f32.mrf.mxu0
        %v1588 = vadd.f32 %v1338, %v1587
        %1589 = vmatprep.mubr.f32.mxu0 0.0
        %1590 = vmatmul.mubr.f32.gmra.mxu0 %v1386
        %v1591 = vpop.f32.mrf.mxu0
        %v1592 = vadd.f32 %v1342, %v1591
        %v1593 = vpop.f32.mrf.mxu0
        %v1594 = vadd.f32 %v1344, %v1593
        %1595 = vmatprep.mubr.f32.mxu0 0.0
        %1596 = vmatmul.mubr.f32.gmra.mxu0 %v1389
        %v1597 = vpop.f32.mrf.mxu0
        %v1598 = vadd.f32 %v1348, %v1597
        %v1599 = vpop.f32.mrf.mxu0
        %v1600 = vadd.f32 %v1350, %v1599
        %1601 = vmatprep.mubr.f32.mxu0 0.0
        %1602 = vmatmul.mubr.f32.gmra.mxu0 %v1392
        %v1603 = vpop.f32.mrf.mxu0
        %v1604 = vadd.f32 %v1354, %v1603
        %v1605 = vpop.f32.mrf.mxu0
        %v1606 = vadd.f32 %v1356, %v1605
        %1607 = vmatprep.mubr.f32.mxu0 0.0
        %1608 = vmatmul.mubr.f32.gmra.mxu0 %v1395
        %v1609 = vpop.f32.mrf.mxu0
        %v1610 = vadd.f32 %v1360, %v1609
        %v1611 = vpop.f32.mrf.mxu0
        %v1612 = vadd.f32 %v1362, %v1611
        %1613 = vmatprep.mubr.f32.mxu0 0.0
        %1614 = vmatmul.mubr.f32.gmra.mxu0 %v1398
        %v1615 = vpop.f32.mrf.mxu0
        %v1616 = vadd.f32 %v1366, %v1615
        %v1617 = vpop.f32.mrf.mxu0
        %v1618 = vadd.f32 %v1368, %v1617
        %1619 = vmatprep.mubr.f32.mxu0 0.0
        %1620 = vmatmul.mubr.f32.gmra.mxu0 %v1401
        %v1621 = vpop.f32.mrf.mxu0
        %v1622 = vadd.f32 %v1372, %v1621
        %v1623 = vpop.f32.mrf.mxu0
        %v1624 = vadd.f32 %v1374, %v1623
        %1625 = vmatprep.mubr.f32.mxu0 0.0
        %1626 = vmatmul.mubr.f32.gmra.mxu0 %v1404
        %v1627 = vpop.f32.mrf.mxu0
        %v1628 = vadd.f32 %v1378, %v1627
        %v1629 = vpop.f32.mrf.mxu0
        %v1630 = vadd.f32 %v1380, %v1629
        %1631 = vdwg.mxu0
        %1632 = vset.pattern.permute.xlu0 5
        %1633 = vperm.xlu0 %1632, %v321
        %v1634 = vpop.permute.xlu0 %1633
        %1636 = vset.pattern.permute.xlu0 5
        %1637 = vperm.xlu0 %1636, %v322
        %v1638 = vpop.permute.xlu0 %1637
        %1640 = vset.pattern.permute.xlu0 5
        %1641 = vperm.xlu0 %1640, %v323
        %v1642 = vpop.permute.xlu0 %1641
        %1644 = vset.pattern.permute.xlu0 5
        %1645 = vperm.xlu0 %1644, %v324
        %v1646 = vpop.permute.xlu0 %1645
        %1648 = vset.pattern.permute.xlu0 5
        %1649 = vperm.xlu0 %1648, %v325
        %v1650 = vpop.permute.xlu0 %1649
        %1652 = vset.pattern.permute.xlu0 5
        %1653 = vperm.xlu0 %1652, %v326
        %v1654 = vpop.permute.xlu0 %1653
        %1656 = vset.pattern.permute.xlu0 5
        %1657 = vperm.xlu0 %1656, %v327
        %v1658 = vpop.permute.xlu0 %1657
        %1660 = vset.pattern.permute.xlu0 5
        %1661 = vperm.xlu0 %1660, %v328
        %v1662 = vpop.permute.xlu0 %1661
        %v1664 = vadd.f32 %v1473, %v1634
        %v1665 = vadd.f32 %v1475, %v1634
        %v1666 = vadd.f32 %v1586, %v1634
        %v1667 = vadd.f32 %v1588, %v1634
        %v1668 = vadd.f32 %v1479, %v1638
        %v1669 = vadd.f32 %v1481, %v1638
        %v1670 = vadd.f32 %v1592, %v1638
        %v1671 = vadd.f32 %v1594, %v1638
        %v1672 = vadd.f32 %v1485, %v1642
        %v1673 = vadd.f32 %v1487, %v1642
        %v1674 = vadd.f32 %v1598, %v1642
        %v1675 = vadd.f32 %v1600, %v1642
        %v1676 = vadd.f32 %v1491, %v1646
        %v1677 = vadd.f32 %v1493, %v1646
        %v1678 = vadd.f32 %v1604, %v1646
        %v1679 = vadd.f32 %v1606, %v1646
        %v1680 = vadd.f32 %v1497, %v1650
        %v1681 = vadd.f32 %v1499, %v1650
        %v1682 = vadd.f32 %v1610, %v1650
        %v1683 = vadd.f32 %v1612, %v1650
        %v1684 = vadd.f32 %v1503, %v1654
        %v1685 = vadd.f32 %v1505, %v1654
        %v1686 = vadd.f32 %v1616, %v1654
        %v1687 = vadd.f32 %v1618, %v1654
        %v1688 = vadd.f32 %v1509, %v1658
        %v1689 = vadd.f32 %v1511, %v1658
        %v1690 = vadd.f32 %v1622, %v1658
        %v1691 = vadd.f32 %v1624, %v1658
        %v1692 = vadd.f32 %v1515, %v1662
        %v1693 = vadd.f32 %v1517, %v1662
        %v1694 = vadd.f32 %v1628, %v1662
        %v1695 = vadd.f32 %v1630, %v1662
        %v1696 = vmax.f32 %v1664, 0.0
        %v1697 = vmax.f32 %v1665, 0.0
        %v1698 = vmax.f32 %v1666, 0.0
        %v1699 = vmax.f32 %v1667, 0.0
        %v1700 = vmax.f32 %v1668, 0.0
        %v1701 = vmax.f32 %v1669, 0.0
        %v1702 = vmax.f32 %v1670, 0.0
        %v1703 = vmax.f32 %v1671, 0.0
        %v1704 = vmax.f32 %v1672, 0.0
        %v1705 = vmax.f32 %v1673, 0.0
        %v1706 = vmax.f32 %v1674, 0.0
        %v1707 = vmax.f32 %v1675, 0.0
        %v1708 = vmax.f32 %v1676, 0.0
        %v1709 = vmax.f32 %v1677, 0.0
        %v1710 = vmax.f32 %v1678, 0.0
        %v1711 = vmax.f32 %v1679, 0.0
        %v1712 = vmax.f32 %v1680, 0.0
        %v1713 = vmax.f32 %v1681, 0.0
        %v1714 = vmax.f32 %v1682, 0.0
        %v1715 = vmax.f32 %v1683, 0.0
        %v1716 = vmax.f32 %v1684, 0.0
        %v1717 = vmax.f32 %v1685, 0.0
        %v1718 = vmax.f32 %v1686, 0.0
        %v1719 = vmax.f32 %v1687, 0.0
        %v1720 = vmax.f32 %v1688, 0.0
        %v1721 = vmax.f32 %v1689, 0.0
        %v1722 = vmax.f32 %v1690, 0.0
        %v1723 = vmax.f32 %v1691, 0.0
        %v1724 = vmax.f32 %v1692, 0.0
        %v1725 = vmax.f32 %v1693, 0.0
        %v1726 = vmax.f32 %v1694, 0.0
        %v1727 = vmax.f32 %v1695, 0.0
        %v1728 = vadd.f32 %v1696, %v829
        %v1729 = vadd.f32 %v1697, %v831
        %v1730 = vadd.f32 %v1698, %v990
        %v1731 = vadd.f32 %v1699, %v992
        %v1732 = vadd.f32 %v1700, %v835
        %v1733 = vadd.f32 %v1701, %v837
        %v1734 = vadd.f32 %v1702, %v996
        %v1735 = vadd.f32 %v1703, %v998
        %v1736 = vadd.f32 %v1704, %v841
        %v1737 = vadd.f32 %v1705, %v843
        %v1738 = vadd.f32 %v1706, %v1002
        %v1739 = vadd.f32 %v1707, %v1004
        %v1740 = vadd.f32 %v1708, %v847
        %v1741 = vadd.f32 %v1709, %v849
        %v1742 = vadd.f32 %v1710, %v1008
        %v1743 = vadd.f32 %v1711, %v1010
        %v1744 = vadd.f32 %v1712, %v853
        %v1745 = vadd.f32 %v1713, %v855
        %v1746 = vadd.f32 %v1714, %v1014
        %v1747 = vadd.f32 %v1715, %v1016
        %v1748 = vadd.f32 %v1716, %v859
        %v1749 = vadd.f32 %v1717, %v861
        %v1750 = vadd.f32 %v1718, %v1020
        %v1751 = vadd.f32 %v1719, %v1022
        %v1752 = vadd.f32 %v1720, %v865
        %v1753 = vadd.f32 %v1721, %v867
        %v1754 = vadd.f32 %v1722, %v1026
        %v1755 = vadd.f32 %v1723, %v1028
        %v1756 = vadd.f32 %v1724, %v871
        %v1757 = vadd.f32 %v1725, %v873
        %v1758 = vadd.f32 %v1726, %v1032
        %v1759 = vadd.f32 %v1727, %v1034
        %1760 = vst [vmem:[%s241] sm:$0xff] %v1728
        %1761 = vst [vmem:[%s241 + $0x8] sm:$0xff] %v1729
        %1762 = vst [vmem:[%s241 + $0x10] sm:$0xff] %v1730
        %1763 = vst [vmem:[%s241 + $0x18] sm:$0xff] %v1731
        %1764 = vst [vmem:[%s241 + $0x20] sm:$0xff] %v1732
        %1765 = vst [vmem:[%s241 + $0x28] sm:$0xff] %v1733
        %1766 = vst [vmem:[%s241 + $0x30] sm:$0xff] %v1734
        %1767 = vst [vmem:[%s241 + $0x38] sm:$0xff] %v1735
        %1768 = vst [vmem:[%s241 + $0x40] sm:$0xff] %v1736
        %1769 = vst [vmem:[%s241 + $0x48] sm:$0xff] %v1737
        %1770 = vst [vmem:[%s241 + $0x50] sm:$0xff] %v1738
        %1771 = vst [vmem:[%s241 + $0x58] sm:$0xff] %v1739
        %1772 = vst [vmem:[%s241 + $0x60] sm:$0xff] %v1740
        %1773 = vst [vmem:[%s241 + $0x68] sm:$0xff] %v1741
        %1774 = vst [vmem:[%s241 + $0x70] sm:$0xff] %v1742
        %1775 = vst [vmem:[%s241 + $0x78] sm:$0xff] %v1743
        %1776 = vst [vmem:[%s241 + $0x80] sm:$0xff] %v1744
        %1777 = vst [vmem:[%s241 + $0x88] sm:$0xff] %v1745
        %1778 = vst [vmem:[%s241 + $0x90] sm:$0xff] %v1746
        %1779 = vst [vmem:[%s241 + $0x98] sm:$0xff] %v1747
        %1780 = vst [vmem:[%s241 + $0xa0] sm:$0xff] %v1748
        %1781 = vst [vmem:[%s241 + $0xa8] sm:$0xff] %v1749
        %1782 = vst [vmem:[%s241 + $0xb0] sm:$0xff] %v1750
        %1783 = vst [vmem:[%s241 + $0xb8] sm:$0xff] %v1751
        %1784 = vst [vmem:[%s241 + $0xc0] sm:$0xff] %v1752
        %1785 = vst [vmem:[%s241 + $0xc8] sm:$0xff] %v1753
        %1786 = vst [vmem:[%s241 + $0xd0] sm:$0xff] %v1754
        %1787 = vst [vmem:[%s241 + $0xd8] sm:$0xff] %v1755
        %1788 = vst [vmem:[%s241 + $0xe0] sm:$0xff] %v1756
        %1789 = vst [vmem:[%s241 + $0xe8] sm:$0xff] %v1757
        %1790 = vst [vmem:[%s241 + $0xf0] sm:$0xff] %v1758
        %1791 = vst [vmem:[%s241 + $0xf8] sm:$0xff] %v1759
        %s1792 = sand.u32 %s138, 1
        %s1793 = scalar_lea.sflag [#allocation3], %s1792
        %s1794 = sand.u32 %s138, 1
        %s1795 = smul.addr %s1794, 256
        %s1796 = scalar_lea.vmem [#allocation2], %s1795
        // Predicated region
        $region37: #{tpu_custom_call.1} parent=35 // pred_check
          %p1797 = pneg %p148
        $region38: #{tpu_custom_call.1} parent=35 // pred_check_branch
          %1799 = sbr.rel (%p1797) target = $region40
        $region39: #{tpu_custom_call.1} parent=35 // pred_region
          %s1800 = smul.u32 4, %s23
          %s1802 = ssub.s32 4096, 4096
          %1803 = vsyncadd %s1793, %s1802
          %s1804 = smul.addr %s22, 32
          %s1805 = sadd.s32 %s1800, %s1804
          %s1806 = smul.addr %s1805, 128
          %s1807 = scalar_lea.hbm %s4, %s1806
          %s1808 = sshll.u32 %s1796, 4
          %s1809 = int_to_ptr.vmem [resolvable:$true] %s1808
          %1814 = dma.vmem_to_hbm [thread:$0]  %s1809, 4096, %s1807, %s1793, 512, 512, 32
        $region40: #{tpu_custom_call.1} parent=35 // pred_fallthru
          _
      $region36: #{tpu_custom_call.1} parent=5 // pred_fallthru
        _
      %p1815 = scmp.le.s32.totalorder 2, %s13
      // Predicated region
      $region41: #{tpu_custom_call.1} parent=5 // pred_check
        %p1816 = pneg %p1815
      $region42: #{tpu_custom_call.1} parent=5 // pred_check_branch
        %1818 = sbr.rel (%p1816) target = $region44
      $region43: #{tpu_custom_call.1} parent=5 // pred_region
        %s1819 = ssub.s32 %s13, 2
        // Predicated region
        $region45: #{tpu_custom_call.1} parent=43 // pred_check
          %p1820 = pneg %p154
        $region46: #{tpu_custom_call.1} parent=43 // pred_check_branch
          %1822 = sbr.rel (%p1820) target = $region48
        $region47: #{tpu_custom_call.1} parent=43 // pred_region
          %s1823 = sand.u32 %s139, 1
          %s1824 = scalar_lea.sflag [#allocation3], %s1823
          %s1825 = sand.u32 %s139, 1
          %s1826 = smul.addr %s1825, 256
          %s1827 = scalar_lea.vmem [#allocation2], %s1826
          %1828 = dma.done %s1824, 4096
        $region48: #{tpu_custom_call.1} parent=43 // pred_fallthru
          _
      $region44: #{tpu_custom_call.1} parent=5 // pred_fallthru
        _
    $region6: #{tpu_custom_call.1} parent=1 // loop_footer
      %s17 = sadd.s32 1, %s13
    $region7: #{tpu_custom_call.1} parent=1 // loop_footer_branch
      %12 = sbr.rel target = $region3
    $region8: #{tpu_custom_call.1} parent=1 // loop_exit
      _
    %1829 = vsyncpa [#allocation3], 1
    %s1830 = scalar_lea.sflag [#allocation3], 1
    %1831 = vsyncpa %s1830, 1

</llo_original>
